<compile_context>
chip_gen: v7x
topology: tpu7x:2x2x1
jax: 0.10.0
libtpu: 0.0.40
codegen_flags: <defaults>
</compile_context>

<pallas_src>
import functools

import jax
import jax.numpy as jnp
from jax.experimental import pallas as pl
from jax.experimental.pallas import tpu as pltpu

T = 6            # number of time steps
THRESH = 1.0     # LIFSpike threshold
TAU = 0.5        # LIFSpike leak


# ---------------------------------------------------------------------------
# helpers / generation-aware VMEM budgets
# ---------------------------------------------------------------------------
def round_up(x, m):
    return (x + m - 1) // m * m


def pick_div(dim, candidates):
    for c in candidates:
        if dim % c == 0:
            return c
    return dim  # full dimension is always a legal block


def _vmem_capacity_bytes():
    try:
        return int(pltpu.get_tpu_info().vmem_capacity_bytes)
    except Exception:
        return 64 * 1024 * 1024          # conservative fallback (v7x-sized)


VMEM_CAP = _vmem_capacity_bytes()
# Explicit scoped-VMEM limit per pallas_call: 64 MiB on 128-MiB parts
# (v5e/v6e), 32 MiB on v7x (64 MiB physical). Tile budgets leave headroom.
VMEM_LIMIT = min(VMEM_CAP // 2, 64 * 1024 * 1024)
TILE_BUDGET = (VMEM_LIMIT * 3) // 4


# ---------------------------------------------------------------------------
# Pallas kernel 1: fused  out = (A @ W) * scale + bias
#   (stem conv, stride-2 convs via small im2col, 1x1 downsample, FC layers)
#   A, W: bf16 (MXU-native); accumulator + epilogue: f32.
# ---------------------------------------------------------------------------
def _mm_scale_bias_kernel(a_ref, w_ref, s_ref, b_ref, o_ref, acc_ref):
    @pl.when(pl.program_id(2) == 0)
    def _init():
        acc_ref[...] = jnp.zeros_like(acc_ref)

    acc_ref[...] += jnp.dot(a_ref[...], w_ref[...],
                            preferred_element_type=jnp.float32)

    @pl.when(pl.program_id(2) == pl.num_programs(2) - 1)
    def _finish():
        o_ref[...] = (acc_ref[...] * s_ref[...] + b_ref[...]).astype(o_ref.dtype)


MM_TM = [1024, 768, 512, 384, 256, 128, 64, 32, 16, 8]
MM_TK = [4608, 4096, 2304, 2048, 1536, 1152, 1024, 768, 512, 384, 256, 128]


def _choose_mm_tiles(Mp, Kp, Np, out_bytes):
    """Largest MXU-friendly (tm, tk, tn) fitting the generation-aware budget.
    Full-K tiles are preferred so the reduction grid axis disappears."""
    tn = pick_div(Np, [512, 256, 128])
    for tm in MM_TM:
        if Mp % tm:
            continue
        for tk in [Kp] + MM_TK:
            if tk > Kp or Kp % tk:
                continue
            vmem = (2 * (tm * tk + tk * tn) * 2       # dbl-buffered bf16 A / W
                    + tm * tn * 4                     # f32 accumulator scratch
                    + 2 * tm * tn * out_bytes)        # dbl-buffered output
            if vmem <= TILE_BUDGET:
                return tm, tk, tn
    return pick_div(Mp, [8]), pick_div(Kp, [128]), tn


def matmul_scale_bias(A, W, scale, bias, out_dtype=jnp.bfloat16):
    """A:[M,K] @ W:[K,N] * scale[N] + bias[N] -> [M,N] in out_dtype."""
    M, K = A.shape
    _, N = W.shape
    Mp, Kp, Np = round_up(M, 8), round_up(K, 128), round_up(N, 128)
    tm, tk, tn = _choose_mm_tiles(Mp, Kp, Np, jnp.dtype(out_dtype).itemsize)

    A = A.astype(jnp.bfloat16)
    W = W.astype(jnp.bfloat16)
    if Mp != M or Kp != K:                        # skip no-op pads
        A = jnp.pad(A, ((0, Mp - M), (0, Kp - K)))
    if Kp != K or Np != N:
        W = jnp.pad(W, ((0, Kp - K), (0, Np - N)))
    s = scale.astype(jnp.float32)
    b = bias.astype(jnp.float32)
    if Np != N:
        s = jnp.pad(s, (0, Np - N))
        b = jnp.pad(b, (0, Np - N))
    s = s.reshape(1, Np)
    b = b.reshape(1, Np)

    out = pl.pallas_call(
        _mm_scale_bias_kernel,
        out_shape=jax.ShapeDtypeStruct((Mp, Np), out_dtype),
        grid_spec=pltpu.PrefetchScalarGridSpec(
            num_scalar_prefetch=0,
            grid=(Mp // tm, Np // tn, Kp // tk),
            in_specs=[
                pl.BlockSpec((tm, tk), lambda i, j, k: (i, k)),
                pl.BlockSpec((tk, tn), lambda i, j, k: (k, j)),
                pl.BlockSpec((1, tn), lambda i, j, k: (0, j)),
                pl.BlockSpec((1, tn), lambda i, j, k: (0, j)),
            ],
            out_specs=pl.BlockSpec((tm, tn), lambda i, j, k: (i, j)),
            scratch_shapes=[pltpu.VMEM((tm, tn), jnp.float32)],
        ),
        compiler_params=pltpu.CompilerParams(
            dimension_semantics=("parallel", "parallel", "arbitrary"),
            vmem_limit_bytes=VMEM_LIMIT),
    )(A, W, s, b)
    if Mp != M or Np != N:
        out = out[:M, :N]
    return out


# ---------------------------------------------------------------------------
# Pallas kernel 2: implicit-GEMM 3x3 / stride-1 / pad-1 conv + folded BN.
#
# Per grid step one padded image (flattened [Hp*Wp, Cin] with small guard rows)
# is resident in VMEM; the 9 taps are shifted row-windows of that slab:
#   c_flat[r] = sum_{kh,kw} A[r + g_f + kh*Wp + kw - 1] @ W[kh,kw]
# where r = h*Wp + wq.  Columns wq=0 and wq=W+1 of the result are wrap-around
# garbage and are sliced off in the wrapper; no im2col ever hits HBM.
# ---------------------------------------------------------------------------
def _conv3x3_kernel(a_ref, w_ref, s_ref, b_ref, o_ref, *, ro, cin, offs):
    tn = o_ref.shape[-1]
    acc = jnp.zeros((ro, tn), jnp.float32)
    for t, off in enumerate(offs):                 # 9 taps, static unrolled
        acc += jnp.dot(a_ref[off:off + ro, :],
                       w_ref[t * cin:(t + 1) * cin, :],
                       preferred_element_type=jnp.float32)
    o_ref[...] = (acc * s_ref[...] + b_ref[...]).astype(o_ref.dtype)


def conv3x3_bn_implicit(x, p, out_dtype=jnp.bfloat16):
    """x: [T, B, H, W, Cin] -> [T, B, H, W, Cout] (3x3, stride 1, pad 1 + BN)."""
    Tt, B, H, W, Cin = x.shape
    Cout = p['scale'].shape[0]
    Hp, Wp = H + 2, W + 2
    NI = Tt * B
    RO = H * Wp                                    # per-image output rows
    g_f = 8                                        # front guard rows (>= 1)
    RA = round_up(g_f + Hp * Wp + 1, 8)            # back guard >= 1, 8-aligned
    offs = tuple(g_f + kh * Wp + kw - 1 for kh in range(3) for kw in range(3))

    xp = jnp.pad(x.astype(jnp.bfloat16),
                 ((0, 0), (0, 0), (1, 1), (1, 1), (0, 0)))
    A = jnp.pad(xp.reshape(NI, Hp * Wp, Cin),
                ((0, 0), (g_f, RA - g_f - Hp * Wp), (0, 0)))

    wt = p['w'].astype(jnp.bfloat16)               # [9*Cin, Cout]
    s = p['scale'].astype(jnp.float32).reshape(1, Cout)
    b = p['bias'].astype(jnp.float32).reshape(1, Cout)

    tn = pick_div(Cout, [128])
    for cand in [512, 256, 128]:                   # widest lane-dense Cout tile
        if Cout % cand:
            continue
        foot = (2 * RA * Cin * 2 + 2 * 9 * Cin * cand * 2
                + 2 * RO * cand * 2 + 2 * RO * cand * 4)
        if foot <= TILE_BUDGET:
            tn = cand
            break

    kernel = functools.partial(_conv3x3_kernel, ro=RO, cin=Cin, offs=offs)
    out = pl.pallas_call(
        kernel,
        out_shape=jax.ShapeDtypeStruct((NI, RO, Cout), out_dtype),
        grid=(Cout // tn, NI),                     # images innermost; >=2 blocks
        in_specs=[
            pl.BlockSpec((None, RA, Cin), lambda j, n: (n, 0, 0)),
            pl.BlockSpec((9 * Cin, tn), lambda j, n: (0, j)),
            pl.BlockSpec((1, tn), lambda j, n: (0, j)),
            pl.BlockSpec((1, tn), lambda j, n: (0, j)),
        ],
        out_specs=pl.BlockSpec((None, RO, tn), lambda j, n: (n, 0, j)),
        compiler_params=pltpu.CompilerParams(
            dimension_semantics=("parallel", "parallel"),
            vmem_limit_bytes=VMEM_LIMIT),
    )(A, wt, s, b)
    out = out.reshape(Tt, B, H, Wp, Cout)[:, :, :, 1:W + 1, :]
    return out


# ---------------------------------------------------------------------------
# Pallas kernel 3: LIF spiking neuron (loop over T, f32 membrane carry),
#                  with residual-add and residual-BN-affine variants.
# ---------------------------------------------------------------------------
def _lif_step(mem, z):
    mem = mem * TAU + z
    spk = mem > THRESH
    return jnp.where(spk, 0.0, mem), spk           # hard reset


def _lif_kernel(x_ref, o_ref):
    mem = jnp.zeros(x_ref.shape[1:], jnp.float32)
    for t in range(x_ref.shape[0]):                # T=6, static unrolled
        mem, spk = _lif_step(mem, x_ref[t].astype(jnp.float32))
        o_ref[t] = spk.astype(o_ref.dtype)


def _lif_add_kernel(y_ref, r_ref, o_ref):
    mem = jnp.zeros(y_ref.shape[1:], jnp.float32)
    for t in range(y_ref.shape[0]):
        z = y_ref[t].astype(jnp.float32) + r_ref[t].astype(jnp.float32)
        mem, spk = _lif_step(mem, z)
        o_ref[t] = spk.astype(o_ref.dtype)


def _lif_res_kernel(y_ref, r_ref, s_ref, b_ref, o_ref):
    sc = s_ref[...].astype(jnp.float32)            # (1, tc)
    bi = b_ref[...].astype(jnp.float32)            # (1, tc)
    mem = jnp.zeros(y_ref.shape[1:], jnp.float32)
    for t in range(y_ref.shape[0]):
        z = y_ref[t].astype(jnp.float32) + r_ref[t].astype(jnp.float32) * sc + bi
        mem, spk = _lif_step(mem, z)
        o_ref[t] = spk.astype(o_ref.dtype)


def _lif_flat(x):
    Tt = x.shape[0]
    C = x.shape[-1]
    P = 1
    for d in x.shape[1:-1]:
        P *= d
    return Tt, P, C


def _lif_tiles(P, C, Tt, n_streams):
    tc = C                                         # lane-dense full-C stores
    cap = max(8, P // 2) if P >= 16 else P         # >=2 row blocks (v7x 2 TCs)
    for tm in [1024, 768, 512, 384, 256, 128, 64, 32, 16, 8]:
        if tm > cap or P % tm:
            continue
        foot = 2 * n_streams * Tt * tm * tc * 2 + 2 * tm * tc * 4
        if foot <= TILE_BUDGET:
            return tm, tc
    return (8 if P % 8 == 0 else P), tc


def _lif_call(kernel, arrays, vectors, n_streams):
    Tt, P, C = _lif_flat(arrays[0])
    flat = [a.reshape(Tt, P, C).astype(jnp.bfloat16) for a in arrays]
    vecs = [v.astype(jnp.float32).reshape(1, C) for v in vectors]
    tm, tc = _lif_tiles(P, C, Tt, n_streams)
    spec = pl.BlockSpec((Tt, tm, tc), lambda i, j: (0, i, j))
    vspec = pl.BlockSpec((1, tc), lambda i, j: (0, j))
    out = pl.pallas_call(
        kernel,
        out_shape=jax.ShapeDtypeStruct((Tt, P, C), jnp.bfloat16),
        grid=(P // tm, C // tc),
        in_specs=[spec] * len(flat) + [vspec] * len(vecs),
        out_specs=spec,
        compiler_params=pltpu.CompilerParams(
            dimension_semantics=("parallel", "parallel"),
            vmem_limit_bytes=VMEM_LIMIT),
    )(*flat, *vecs)
    return out.reshape(arrays[0].shape)


def lif(x):
    """LIF(x), x: [T, B, H, W, C] -> bf16 spikes, same shape."""
    return _lif_call(_lif_kernel, [x], [], 2)


def lif_add(y, r):
    """LIF(y + r)  (downsample residual path, no affine)."""
    return _lif_call(_lif_add_kernel, [y, r], [], 3)


def lif_res(y, r, scale, bias):
    """LIF(y + r * scale + bias)  (identity residual through BN)."""
    return _lif_call(_lif_res_kernel, [y, r], [scale, bias], 3)


# ---------------------------------------------------------------------------
# conv via small im2col (stem 3x3 with Cin=3, stride-2 3x3, 1x1 downsample)
# ---------------------------------------------------------------------------
def conv_bn_nhwc(xb, p, ksize, stride, out_dtype=jnp.bfloat16):
    """xb: [N, H, W, Cin] -> [N, Ho, Wo, Cout] (conv + folded BN)."""
    N, H, W, Cin = xb.shape
    Cout = p['scale'].shape[0]
    pad = 1 if ksize == 3 else 0
    Ho = (H + 2 * pad - ksize) // stride + 1
    Wo = (W + 2 * pad - ksize) // stride + 1

    xb = xb.astype(jnp.bfloat16)
    if pad:
        xb = jnp.pad(xb, ((0, 0), (pad, pad), (pad, pad), (0, 0)))

    cols = []
    for kh in range(ksize):
        for kw in range(ksize):
            cols.append(jax.lax.slice(
                xb,
                (0, kh, kw, 0),
                (N, kh + stride * (Ho - 1) + 1,
                 kw + stride * (Wo - 1) + 1, Cin),
                (1, stride, stride, 1)))
    A = jnp.concatenate(cols, axis=-1).reshape(N * Ho * Wo, ksize * ksize * Cin)
    out = matmul_scale_bias(A, p['w'], p['scale'], p['bias'], out_dtype)
    return out.reshape(N, Ho, Wo, Cout)


def conv_bn(x, p, ksize, stride, out_dtype=jnp.bfloat16):
    """x: [T, B, H, W, Cin] -> [T, B, Ho, Wo, Cout]."""
    Tt, B = x.shape[0], x.shape[1]
    y = conv_bn_nhwc(x.reshape((Tt * B,) + x.shape[2:]), p, ksize, stride, out_dtype)
    return y.reshape((Tt, B) + y.shape[1:])


# ---------------------------------------------------------------------------
# parameter construction (deterministic, synthetic; weights stored in bf16)
# ---------------------------------------------------------------------------
def init_conv_bn(key, cin, cout, ksize):
    k1, k2, k3, k4, k5, k6 = jax.random.split(key, 6)
    fan_out = cout * ksize * ksize
    w = jax.random.normal(k1, (ksize, ksize, cin, cout), jnp.float32) \
        * jnp.sqrt(2.0 / fan_out)                    # kaiming_normal(fan_out)
    conv_b = 0.05 * jax.random.normal(k2, (cout,), jnp.float32)
    gamma = 1.0 + 0.1 * jax.random.normal(k3, (cout,), jnp.float32)
    beta = 0.1 * jax.random.normal(k4, (cout,), jnp.float32)
    rmean = 0.1 * jax.random.normal(k5, (cout,), jnp.float32)
    rvar = 1.0 + 0.1 * jax.random.uniform(k6, (cout,), jnp.float32)
    scale = gamma / jnp.sqrt(rvar + 1e-5)
    bias = beta + scale * (conv_b - rmean)
    return dict(w=w.reshape(ksize * ksize * cin, cout).astype(jnp.bfloat16),
                scale=scale, bias=bias)


def init_bn(key, c):
    k1, k2, k3, k4 = jax.random.split(key, 4)
    gamma = 1.0 + 0.1 * jax.random.normal(k1, (c,), jnp.float32)
    beta = 0.1 * jax.random.normal(k2, (c,), jnp.float32)
    rmean = 0.1 * jax.random.normal(k3, (c,), jnp.float32)
    rvar = 1.0 + 0.1 * jax.random.uniform(k4, (c,), jnp.float32)
    scale = gamma / jnp.sqrt(rvar + 1e-5)
    bias = beta - scale * rmean
    return scale, bias


def init_linear(key, fin, fout):
    k1, k2 = jax.random.split(key)
    bound = 1.0 / jnp.sqrt(jnp.float32(fin))
    w = jax.random.uniform(k1, (fin, fout), jnp.float32, -bound, bound)
    b = jax.random.uniform(k2, (fout,), jnp.float32, -bound, bound)
    return dict(w=w.astype(jnp.bfloat16),
                scale=jnp.ones((fout,), jnp.float32), bias=b)


# static network structure (name, in_ch, out_ch, num_blocks, first_stride)
LAYER_CFG = [
    ('layer1', 128, 128, 3, 1),
    ('layer2', 128, 256, 3, 2),
    ('layer3', 256, 512, 2, 2),
]


def build_params(key):
    keys = iter(jax.random.split(key, 64))
    params = {'conv1': init_conv_bn(next(keys), 3, 128, 3)}
    for name, in_ch, out_ch, nblk, stride in LAYER_CFG:
        blocks = []
        cin = in_ch
        for bidx in range(nblk):
            s = stride if bidx == 0 else 1
            bp = {'conv1': init_conv_bn(next(keys), cin, out_ch, 3),
                  'conv2': init_conv_bn(next(keys), out_ch, out_ch, 3)}
            if s != 1 or cin != out_ch:
                bp['down'] = init_conv_bn(next(keys), cin, out_ch, 1)
            else:
                sc, bi = init_bn(next(keys), out_ch)
                bp['bn_scale'] = sc
                bp['bn_bias'] = bi
            blocks.append(bp)
            cin = out_ch
        params[name] = blocks
    params['fc1'] = init_linear(next(keys), 512 * 4 * 4, 256)
    params['fc2'] = init_linear(next(keys), 256, 100)
    return params


# ---------------------------------------------------------------------------
# model forward
# ---------------------------------------------------------------------------
def basic_block(x, bp, stride):
    if stride == 1:
        y = conv3x3_bn_implicit(x, bp['conv1'])     # Layer(conv3x3 + BN)
    else:
        y = conv_bn(x, bp['conv1'], 3, stride)      # small stride-2 im2col path
    y = lif(y)                                      # sn1
    y = conv3x3_bn_implicit(y, bp['conv2'])         # Layer(conv3x3 + BN)
    if 'down' in bp:                                # downsample = conv1x1 + BN
        right = conv_bn(x, bp['down'], 1, stride)
        return lif_add(y, right)                    # y += right ; sn2
    return lif_res(y, x, bp['bn_scale'], bp['bn_bias'])   # right = BN(x)


@jax.jit
def resnet_forward(params, x_nchw):
    x = jnp.transpose(x_nchw, (0, 2, 3, 1)).astype(jnp.bfloat16)    # NHWC

    # conv1 + BN: input is identical for all T time steps, so compute once
    # over [B,H,W] and broadcast across T (6x less conv1 work & traffic).
    y1 = conv_bn_nhwc(x, params['conv1'], 3, 1)                     # [B,32,32,128]
    x = jnp.broadcast_to(y1[None], (T,) + y1.shape)                 # add_dimention
    x = lif(x)                                                      # sn1

    for name, in_ch, out_ch, nblk, stride in LAYER_CFG:
        for bidx in range(nblk):
            s = stride if bidx == 0 else 1
            x = basic_block(x, params[name][bidx], s)

    # AvgPool2d(2): negligible glue, done in plain JAX (f32).
    Tt, Bn, H, W, C = x.shape
    x = x.astype(jnp.float32).reshape(Tt, Bn, H // 2, 2, W // 2, 2, C).mean(axis=(3, 5))

    # torch.flatten(x, 2) on [B, T, C, H, W] -> (C, H, W) feature ordering
    x = jnp.transpose(x, (0, 1, 4, 2, 3)).reshape(Tt * Bn, -1)      # [T*B, 8192]

    # TODO(synk): Dropout(0.25) is identity in eval mode; train-mode mask not implemented.
    a = matmul_scale_bias(x, params['fc1']['w'], params['fc1']['scale'],
                          params['fc1']['bias'], out_dtype=jnp.bfloat16)   # fc1
    a = matmul_scale_bias(a, params['fc2']['w'], params['fc2']['scale'],
                          params['fc2']['bias'], out_dtype=jnp.float32)    # fc2
    out = a.reshape(Tt, Bn, 100)
    return jnp.transpose(out, (1, 0, 2))                            # [B, T, 100]


# ---------------------------------------------------------------------------
if __name__ == "__main__":
    key = jax.random.PRNGKey(0)
    pkey, xkey, ckey = jax.random.split(key, 3)

    # small self-check: implicit-GEMM conv matches the im2col reference path
    ck1, ck2 = jax.random.split(ckey)
    p_chk = init_conv_bn(ck1, 128, 128, 3)
    x_chk = (jax.random.uniform(ck2, (2, 2, 8, 8, 128)) < 0.5).astype(jnp.bfloat16)
    y_imp = conv3x3_bn_implicit(x_chk, p_chk).astype(jnp.float32)
    y_ref = conv_bn(x_chk, p_chk, 3, 1).astype(jnp.float32)
    assert y_imp.shape == y_ref.shape
    assert float(jnp.max(jnp.abs(y_imp - y_ref))) < 0.1

    params = build_params(pkey)
    x = jax.random.normal(xkey, (2, 3, 32, 32), jnp.float32)        # NCHW input
    out = resnet_forward(params, x)
    out = jax.block_until_ready(out)
    assert out.shape == (2, T, 100), out.shape
    assert jnp.all(jnp.isfinite(out))
    print("KERNEL_OK")
</pallas_src>

<mosaic_0001>
module attributes {stable_mosaic.version = 11 : i64} {
  func.func @_conv3x3_kernel(%arg0: i32, %arg1: i32, %arg2: memref<1x112x128xbf16, #tpu.memory_space<vmem>>, %arg3: memref<1152x128xbf16, #tpu.memory_space<vmem>>, %arg4: memref<1x128xf32, #tpu.memory_space<vmem>>, %arg5: memref<1x128xf32, #tpu.memory_space<vmem>>, %arg6: memref<1x80x128xbf16, #tpu.memory_space<vmem>>) attributes {dimension_semantics = [#tpu.dimension_semantics<parallel>, #tpu.dimension_semantics<parallel>], iteration_bounds = array<i64: 1, 4>, scalar_prefetch = 0 : i64, scratch_operands = 0 : i64, tpu.core_type = #tpu.core_type<tc>, window_params = [{transform_indices = @transform_0, window_bounds = array<i64: 1, 112, 128>}, {transform_indices = @transform_1, window_bounds = array<i64: 1152, 128>}, {transform_indices = @transform_2, window_bounds = array<i64: 1, 128>}, {transform_indices = @transform_3, window_bounds = array<i64: 1, 128>}, {transform_indices = @transform_4, window_bounds = array<i64: 1, 80, 128>}]} {
    %cst = arith.constant 0.000000e+00 : f32
    %0 = vector.broadcast %cst : f32 to vector<80x128xf32>
    %c0 = arith.constant 0 : index
    %c7 = arith.constant 7 : index
    %c0_0 = arith.constant 0 : index
    %1 = vector.load %arg2[%c0, %c7, %c0_0] : memref<1x112x128xbf16, #tpu.memory_space<vmem>>, vector<1x80x128xbf16>
    %2 = vector.shape_cast %1 : vector<1x80x128xbf16> to vector<80x128xbf16>
    %c0_1 = arith.constant 0 : index
    %c0_2 = arith.constant 0 : index
    %3 = vector.load %arg3[%c0_1, %c0_2] : memref<1152x128xbf16, #tpu.memory_space<vmem>>, vector<128x128xbf16>
    %cst_3 = arith.constant dense<0.000000e+00> : vector<80x128xf32>
    %4 = tpu.matmul %2, %3, %cst_3 {dimension_numbers = #tpu.dot_dimension_numbers<[1], [0], [0], [1], [0, 0, 1, 1], [], []>} : vector<80x128xbf16>, vector<128x128xbf16>, vector<80x128xf32> -> vector<80x128xf32>
    %5 = arith.addf %0, %4 : vector<80x128xf32>
    %c0_4 = arith.constant 0 : index
    %c8 = arith.constant 8 : index
    %c0_5 = arith.constant 0 : index
    %6 = vector.load %arg2[%c0_4, %c8, %c0_5] : memref<1x112x128xbf16, #tpu.memory_space<vmem>>, vector<1x80x128xbf16>
    %7 = vector.shape_cast %6 : vector<1x80x128xbf16> to vector<80x128xbf16>
    %c128 = arith.constant 128 : index
    %c0_6 = arith.constant 0 : index
    %8 = vector.load %arg3[%c128, %c0_6] : memref<1152x128xbf16, #tpu.memory_space<vmem>>, vector<128x128xbf16>
    %cst_7 = arith.constant dense<0.000000e+00> : vector<80x128xf32>
    %9 = tpu.matmul %7, %8, %cst_7 {dimension_numbers = #tpu.dot_dimension_numbers<[1], [0], [0], [1], [0, 0, 1, 1], [], []>} : vector<80x128xbf16>, vector<128x128xbf16>, vector<80x128xf32> -> vector<80x128xf32>
    %10 = arith.addf %5, %9 : vector<80x128xf32>
    %c0_8 = arith.constant 0 : index
    %c9 = arith.constant 9 : index
    %c0_9 = arith.constant 0 : index
    %11 = vector.load %arg2[%c0_8, %c9, %c0_9] : memref<1x112x128xbf16, #tpu.memory_space<vmem>>, vector<1x80x128xbf16>
    %12 = vector.shape_cast %11 : vector<1x80x128xbf16> to vector<80x128xbf16>
    %c256 = arith.constant 256 : index
    %c0_10 = arith.constant 0 : index
    %13 = vector.load %arg3[%c256, %c0_10] : memref<1152x128xbf16, #tpu.memory_space<vmem>>, vector<128x128xbf16>
    %cst_11 = arith.constant dense<0.000000e+00> : vector<80x128xf32>
    %14 = tpu.matmul %12, %13, %cst_11 {dimension_numbers = #tpu.dot_dimension_numbers<[1], [0], [0], [1], [0, 0, 1, 1], [], []>} : vector<80x128xbf16>, vector<128x128xbf16>, vector<80x128xf32> -> vector<80x128xf32>
    %15 = arith.addf %10, %14 : vector<80x128xf32>
    %c0_12 = arith.constant 0 : index
    %c17 = arith.constant 17 : index
    %c0_13 = arith.constant 0 : index
    %16 = vector.load %arg2[%c0_12, %c17, %c0_13] : memref<1x112x128xbf16, #tpu.memory_space<vmem>>, vector<1x80x128xbf16>
    %17 = vector.shape_cast %16 : vector<1x80x128xbf16> to vector<80x128xbf16>
    %c384 = arith.constant 384 : index
    %c0_14 = arith.constant 0 : index
    %18 = vector.load %arg3[%c384, %c0_14] : memref<1152x128xbf16, #tpu.memory_space<vmem>>, vector<128x128xbf16>
    %cst_15 = arith.constant dense<0.000000e+00> : vector<80x128xf32>
    %19 = tpu.matmul %17, %18, %cst_15 {dimension_numbers = #tpu.dot_dimension_numbers<[1], [0], [0], [1], [0, 0, 1, 1], [], []>} : vector<80x128xbf16>, vector<128x128xbf16>, vector<80x128xf32> -> vector<80x128xf32>
    %20 = arith.addf %15, %19 : vector<80x128xf32>
    %c0_16 = arith.constant 0 : index
    %c18 = arith.constant 18 : index
    %c0_17 = arith.constant 0 : index
    %21 = vector.load %arg2[%c0_16, %c18, %c0_17] : memref<1x112x128xbf16, #tpu.memory_space<vmem>>, vector<1x80x128xbf16>
    %22 = vector.shape_cast %21 : vector<1x80x128xbf16> to vector<80x128xbf16>
    %c512 = arith.constant 512 : index
    %c0_18 = arith.constant 0 : index
    %23 = vector.load %arg3[%c512, %c0_18] : memref<1152x128xbf16, #tpu.memory_space<vmem>>, vector<128x128xbf16>
    %cst_19 = arith.constant dense<0.000000e+00> : vector<80x128xf32>
    %24 = tpu.matmul %22, %23, %cst_19 {dimension_numbers = #tpu.dot_dimension_numbers<[1], [0], [0], [1], [0, 0, 1, 1], [], []>} : vector<80x128xbf16>, vector<128x128xbf16>, vector<80x128xf32> -> vector<80x128xf32>
    %25 = arith.addf %20, %24 : vector<80x128xf32>
    %c0_20 = arith.constant 0 : index
    %c19 = arith.constant 19 : index
    %c0_21 = arith.constant 0 : index
    %26 = vector.load %arg2[%c0_20, %c19, %c0_21] : memref<1x112x128xbf16, #tpu.memory_space<vmem>>, vector<1x80x128xbf16>
    %27 = vector.shape_cast %26 : vector<1x80x128xbf16> to vector<80x128xbf16>
    %c640 = arith.constant 640 : index
    %c0_22 = arith.constant 0 : index
    %28 = vector.load %arg3[%c640, %c0_22] : memref<1152x128xbf16, #tpu.memory_space<vmem>>, vector<128x128xbf16>
    %cst_23 = arith.constant dense<0.000000e+00> : vector<80x128xf32>
    %29 = tpu.matmul %27, %28, %cst_23 {dimension_numbers = #tpu.dot_dimension_numbers<[1], [0], [0], [1], [0, 0, 1, 1], [], []>} : vector<80x128xbf16>, vector<128x128xbf16>, vector<80x128xf32> -> vector<80x128xf32>
    %30 = arith.addf %25, %29 : vector<80x128xf32>
    %c0_24 = arith.constant 0 : index
    %c27 = arith.constant 27 : index
    %c0_25 = arith.constant 0 : index
    %31 = vector.load %arg2[%c0_24, %c27, %c0_25] : memref<1x112x128xbf16, #tpu.memory_space<vmem>>, vector<1x80x128xbf16>
    %32 = vector.shape_cast %31 : vector<1x80x128xbf16> to vector<80x128xbf16>
    %c768 = arith.constant 768 : index
    %c0_26 = arith.constant 0 : index
    %33 = vector.load %arg3[%c768, %c0_26] : memref<1152x128xbf16, #tpu.memory_space<vmem>>, vector<128x128xbf16>
    %cst_27 = arith.constant dense<0.000000e+00> : vector<80x128xf32>
    %34 = tpu.matmul %32, %33, %cst_27 {dimension_numbers = #tpu.dot_dimension_numbers<[1], [0], [0], [1], [0, 0, 1, 1], [], []>} : vector<80x128xbf16>, vector<128x128xbf16>, vector<80x128xf32> -> vector<80x128xf32>
    %35 = arith.addf %30, %34 : vector<80x128xf32>
    %c0_28 = arith.constant 0 : index
    %c28 = arith.constant 28 : index
    %c0_29 = arith.constant 0 : index
    %36 = vector.load %arg2[%c0_28, %c28, %c0_29] : memref<1x112x128xbf16, #tpu.memory_space<vmem>>, vector<1x80x128xbf16>
    %37 = vector.shape_cast %36 : vector<1x80x128xbf16> to vector<80x128xbf16>
    %c896 = arith.constant 896 : index
    %c0_30 = arith.constant 0 : index
    %38 = vector.load %arg3[%c896, %c0_30] : memref<1152x128xbf16, #tpu.memory_space<vmem>>, vector<128x128xbf16>
    %cst_31 = arith.constant dense<0.000000e+00> : vector<80x128xf32>
    %39 = tpu.matmul %37, %38, %cst_31 {dimension_numbers = #tpu.dot_dimension_numbers<[1], [0], [0], [1], [0, 0, 1, 1], [], []>} : vector<80x128xbf16>, vector<128x128xbf16>, vector<80x128xf32> -> vector<80x128xf32>
    %40 = arith.addf %35, %39 : vector<80x128xf32>
    %c0_32 = arith.constant 0 : index
    %c29 = arith.constant 29 : index
    %c0_33 = arith.constant 0 : index
    %41 = vector.load %arg2[%c0_32, %c29, %c0_33] : memref<1x112x128xbf16, #tpu.memory_space<vmem>>, vector<1x80x128xbf16>
    %42 = vector.shape_cast %41 : vector<1x80x128xbf16> to vector<80x128xbf16>
    %c1024 = arith.constant 1024 : index
    %c0_34 = arith.constant 0 : index
    %43 = vector.load %arg3[%c1024, %c0_34] : memref<1152x128xbf16, #tpu.memory_space<vmem>>, vector<128x128xbf16>
    %cst_35 = arith.constant dense<0.000000e+00> : vector<80x128xf32>
    %44 = tpu.matmul %42, %43, %cst_35 {dimension_numbers = #tpu.dot_dimension_numbers<[1], [0], [0], [1], [0, 0, 1, 1], [], []>} : vector<80x128xbf16>, vector<128x128xbf16>, vector<80x128xf32> -> vector<80x128xf32>
    %45 = arith.addf %40, %44 : vector<80x128xf32>
    %c0_36 = arith.constant 0 : index
    %c0_37 = arith.constant 0 : index
    %46 = vector.load %arg4[%c0_36, %c0_37] : memref<1x128xf32, #tpu.memory_space<vmem>>, vector<1x128xf32>
    %47 = vector.broadcast %46 : vector<1x128xf32> to vector<80x128xf32>
    %48 = arith.mulf %45, %47 : vector<80x128xf32>
    %c0_38 = arith.constant 0 : index
    %c0_39 = arith.constant 0 : index
    %49 = vector.load %arg5[%c0_38, %c0_39] : memref<1x128xf32, #tpu.memory_space<vmem>>, vector<1x128xf32>
    %50 = vector.broadcast %49 : vector<1x128xf32> to vector<80x128xf32>
    %51 = arith.addf %48, %50 : vector<80x128xf32>
    %52 = arith.truncf %51 : vector<80x128xf32> to vector<80x128xbf16>
    %c0_40 = arith.constant 0 : index
    %c0_41 = arith.constant 0 : index
    %c0_42 = arith.constant 0 : index
    %53 = vector.load %arg6[%c0_40, %c0_41, %c0_42] : memref<1x80x128xbf16, #tpu.memory_space<vmem>>, vector<1x80x128xbf16>
    %54 = vector.shape_cast %53 : vector<1x80x128xbf16> to vector<80x128xbf16>
    %55 = vector.shape_cast %52 : vector<80x128xbf16> to vector<1x80x128xbf16>
    tpu.vector_store %arg6[%c0_40, %c0_41, %c0_42], %55 {strides = array<i32>} : memref<1x80x128xbf16, #tpu.memory_space<vmem>>, vector<1x80x128xbf16>,
    return
  }
  func.func @transform_0(%arg0: i32, %arg1: i32) -> (i32, i32, i32) {
    %c0_i32 = arith.constant 0 : i32
    %c0_i32_0 = arith.constant 0 : i32
    %c0_i32_1 = arith.constant 0 : i32
    return %arg1, %c0_i32, %c0_i32_0 : i32, i32, i32
  }
  func.func @transform_1(%arg0: i32, %arg1: i32) -> (i32, i32) {
    %c0_i32 = arith.constant 0 : i32
    %c0_i32_0 = arith.constant 0 : i32
    return %c0_i32, %arg0 : i32, i32
  }
  func.func @transform_2(%arg0: i32, %arg1: i32) -> (i32, i32) {
    %c0_i32 = arith.constant 0 : i32
    %c0_i32_0 = arith.constant 0 : i32
    return %c0_i32, %arg0 : i32, i32
  }
  func.func @transform_3(%arg0: i32, %arg1: i32) -> (i32, i32) {
    %c0_i32 = arith.constant 0 : i32
    %c0_i32_0 = arith.constant 0 : i32
    return %c0_i32, %arg0 : i32, i32
  }
  func.func @transform_4(%arg0: i32, %arg1: i32) -> (i32, i32, i32) {
    %c0_i32 = arith.constant 0 : i32
    %c0_i32_0 = arith.constant 0 : i32
    return %arg1, %c0_i32, %arg0 : i32, i32, i32
  }
}

</mosaic_0001>

<llo_original>
// kernel: tpu_custom_call.1
$region0: #{tpu_custom_call.1}
  #allocation0 [shape = 'u32[]', space=smem, size = 0x4, offset = 0x4, fixed_abs, tag = 'smem constant byte address 0x4 - core index']
  #allocation1 [shape = 'u32[144,128]{1,0:T(1,128)}', space=vmem, size = 0x12000, scoped, tag = 'internal scratch']
  %s0 = inlined_call_operand.hbm [shape: bf16[4,112,128], index: 0, kind: input, shape index: {}]
  %s1 = inlined_call_operand.hbm [shape: bf16[1152,128], index: 1, kind: input, shape index: {}]
  %s2 = inlined_call_operand.vmem [shape: f32[1,128], index: 2, kind: input, shape index: {}]
  %s3 = inlined_call_operand.vmem [shape: f32[1,128], index: 3, kind: input, shape index: {}]
  %s4 = inlined_call_operand.hbm [shape: bf16[4,80,128], index: 4, kind: output, shape index: {}]
  %s5 = sld [smem:[#allocation0]]
  $region57: #{tpu_custom_call.1} parent=0
    _
  %s7 = ssub.s32 1, %s5
  %s8 = scalar_select 0, %s7, %s5
  $region1: #{tpu_custom_call.1} parent=0
    #allocation2 [shape = 'u8[57344]{0}', space=vmem, size = 0xe000, scoped, tag = 'input window, operand 0']
    #allocation3 [shape = 's32[2]{0}', space=sflag, size = 0x8, scoped, tag = 'scoped memory for tpu_custom_call.1']
    #allocation4 [shape = 's32[2]{0}', space=sflag, size = 0x8, scoped, tag = 'scoped memory for tpu_custom_call.1']
    #allocation5 [shape = 'u8[294912]{0}', space=vmem, size = 0x48000, scoped, tag = 'input window, operand 1, single buffered']
    #allocation6 [shape = 's32[1]{0}', space=sflag, size = 0x4, scoped, tag = 'scoped memory for tpu_custom_call.1']
    #allocation7 [shape = 'u8[40960]{0}', space=vmem, size = 0xa000, scoped, tag = 'output window, operand 0']
    %9 = vsyncpa [#allocation3], 0
    %s10 = scalar_lea.sflag [#allocation3], 1
    %11 = vsyncpa %s10, 0
    %12 = vsyncpa [#allocation6], 0
    %13 = vsyncpa [#allocation4], 0
    %s14 = scalar_lea.sflag [#allocation4], 1
    %15 = vsyncpa %s14, 0
    loop: start=0, step=1, limit=6
    $region2: #{tpu_custom_call.1} parent=1 // loop_pre_header
      _
    $region3: #{tpu_custom_call.1} parent=1 // loop_header
      %s17 = sphi 0, %s21
      %p18 = scmp.ge.s32.totalorder %s17, 6
      %s24 = sphi 0, %s36
      %s25 = sphi 0, %s32
      %s26 = sphi 0, %s24
      %s27 = sphi 0, %s25
      %s28 = sphi 0, %s26
      %s29 = sphi 0, %s27
      %s39 = sphi 0, %s41
      %s42 = sphi 0, %s39
      %s43 = sphi 0, %s42
      %s59 = sphi 0, %s43
      %s65 = sphi 0, %s67
      %s68 = sphi 0, %s65
      %s69 = sphi 0, %s68
      %s85 = sphi 0, %s69
      %s91 = sphi 0, %s93
      %s94 = sphi 0, %s91
      %s95 = sphi 0, %s94
      %s111 = sphi 0, %s95
      %s117 = sphi 0, %s119
      %s120 = sphi 0, %s117
      %s121 = sphi 0, %s120
      %s137 = sphi 0, %s121
      %s145 = sphi 0, %s147
      %s148 = sphi 0, %s145
      %s149 = sphi 0, %s148
      %s165 = sphi 0, %s149
    $region4: #{tpu_custom_call.1} parent=1 // loop_header_branch
      %20 = sbr.rel (%p18) target = $region8
    $region5: #{tpu_custom_call.1} parent=1 // loop_body
      %s22 = ssub.s32 %s17, 1
      %s23 = ssub.s32 %s17, 2
      %s30 = sadd.s32 1, %s25
      %p31 = scmp.ge.s32.totalorder %s30, 4
      %s32 = scalar_select %p31, 0, %s30
      %s33 = sadd.s32 1, %s24
      %s34 = scalar_select %p31, %s33, %s24
      %p35 = scmp.ge.s32.totalorder %s34, 1
      %s36 = scalar_select %p35, 0, %s34
      %s37 = ssub.s32 %s25, %s32
      %p38 = scmp.eq.s32.totalorder %s37, 0
      %s40 = sadd.s32 %s39, 1
      %s41 = scalar_select %p38, %s39, %s40
      %p44 = pneg %p38
      %p45 = scmp.eq.s32.totalorder %s17, 3
      %p46 = por %p44, %p45
      %p47 = scmp.ne.s32.totalorder %s39, %s42
      %p48 = scmp.eq.s32.totalorder %s17, 0
      %p49 = por %p47, %p48
      %p50 = scmp.ne.s32.totalorder %s39, %s42
      %p51 = scmp.eq.s32.totalorder %s22, 3
      %p52 = por %p50, %p51
      %p53 = scmp.ne.s32.totalorder %s42, %s43
      %p54 = scmp.eq.s32.totalorder %s22, 0
      %p55 = por %p53, %p54
      %p56 = scmp.ne.s32.totalorder %s42, %s43
      %p57 = scmp.eq.s32.totalorder %s23, 3
      %p58 = por %p56, %p57
      %p60 = scmp.ne.s32.totalorder %s43, %s59
      %p61 = scmp.eq.s32.totalorder %s23, 0
      %p62 = por %p60, %p61
      %s63 = ssub.s32 %s24, %s36
      %p64 = scmp.eq.s32.totalorder %s63, 0
      %s66 = sadd.s32 %s65, 1
      %s67 = scalar_select %p64, %s65, %s66
      %p70 = pneg %p64
      %p71 = scmp.eq.s32.totalorder %s17, 3
      %p72 = por %p70, %p71
      %p73 = scmp.ne.s32.totalorder %s65, %s68
      %p74 = scmp.eq.s32.totalorder %s17, 0
      %p75 = por %p73, %p74
      %p76 = scmp.ne.s32.totalorder %s65, %s68
      %p77 = scmp.eq.s32.totalorder %s22, 3
      %p78 = por %p76, %p77
      %p79 = scmp.ne.s32.totalorder %s68, %s69
      %p80 = scmp.eq.s32.totalorder %s22, 0
      %p81 = por %p79, %p80
      %p82 = scmp.ne.s32.totalorder %s68, %s69
      %p83 = scmp.eq.s32.totalorder %s23, 3
      %p84 = por %p82, %p83
      %p86 = scmp.ne.s32.totalorder %s69, %s85
      %p87 = scmp.eq.s32.totalorder %s23, 0
      %p88 = por %p86, %p87
      %s89 = ssub.s32 %s24, %s36
      %p90 = scmp.eq.s32.totalorder %s89, 0
      %s92 = sadd.s32 %s91, 1
      %s93 = scalar_select %p90, %s91, %s92
      %p96 = pneg %p90
      %p97 = scmp.eq.s32.totalorder %s17, 3
      %p98 = por %p96, %p97
      %p99 = scmp.ne.s32.totalorder %s91, %s94
      %p100 = scmp.eq.s32.totalorder %s17, 0
      %p101 = por %p99, %p100
      %p102 = scmp.ne.s32.totalorder %s91, %s94
      %p103 = scmp.eq.s32.totalorder %s22, 3
      %p104 = por %p102, %p103
      %p105 = scmp.ne.s32.totalorder %s94, %s95
      %p106 = scmp.eq.s32.totalorder %s22, 0
      %p107 = por %p105, %p106
      %p108 = scmp.ne.s32.totalorder %s94, %s95
      %p109 = scmp.eq.s32.totalorder %s23, 3
      %p110 = por %p108, %p109
      %p112 = scmp.ne.s32.totalorder %s95, %s111
      %p113 = scmp.eq.s32.totalorder %s23, 0
      %p114 = por %p112, %p113
      %s115 = ssub.s32 %s24, %s36
      %p116 = scmp.eq.s32.totalorder %s115, 0
      %s118 = sadd.s32 %s117, 1
      %s119 = scalar_select %p116, %s117, %s118
      %p122 = pneg %p116
      %p123 = scmp.eq.s32.totalorder %s17, 3
      %p124 = por %p122, %p123
      %p125 = scmp.ne.s32.totalorder %s117, %s120
      %p126 = scmp.eq.s32.totalorder %s17, 0
      %p127 = por %p125, %p126
      %p128 = scmp.ne.s32.totalorder %s117, %s120
      %p129 = scmp.eq.s32.totalorder %s22, 3
      %p130 = por %p128, %p129
      %p131 = scmp.ne.s32.totalorder %s120, %s121
      %p132 = scmp.eq.s32.totalorder %s22, 0
      %p133 = por %p131, %p132
      %p134 = scmp.ne.s32.totalorder %s120, %s121
      %p135 = scmp.eq.s32.totalorder %s23, 3
      %p136 = por %p134, %p135
      %p138 = scmp.ne.s32.totalorder %s121, %s137
      %p139 = scmp.eq.s32.totalorder %s23, 0
      %p140 = por %p138, %p139
      %s141 = ssub.s32 %s25, %s32
      %s142 = ssub.s32 %s24, %s36
      %s143 = sor.u32 %s141, %s142
      %p144 = scmp.eq.s32.totalorder %s143, 0
      %s146 = sadd.s32 %s145, 1
      %s147 = scalar_select %p144, %s145, %s146
      %p150 = pneg %p144
      %p151 = scmp.eq.s32.totalorder %s17, 3
      %p152 = por %p150, %p151
      %p153 = scmp.ne.s32.totalorder %s145, %s148
      %p154 = scmp.eq.s32.totalorder %s17, 0
      %p155 = por %p153, %p154
      %p156 = scmp.ne.s32.totalorder %s145, %s148
      %p157 = scmp.eq.s32.totalorder %s22, 3
      %p158 = por %p156, %p157
      %p159 = scmp.ne.s32.totalorder %s148, %s149
      %p160 = scmp.eq.s32.totalorder %s22, 0
      %p161 = por %p159, %p160
      %p162 = scmp.ne.s32.totalorder %s148, %s149
      %p163 = scmp.eq.s32.totalorder %s23, 3
      %p164 = por %p162, %p163
      %p166 = scmp.ne.s32.totalorder %s149, %s165
      %p167 = scmp.eq.s32.totalorder %s23, 0
      %p168 = por %p166, %p167
      %p169 = scmp.le.s32.totalorder 1, %s17
      %p170 = scmp.lt.s32.totalorder %s17, 5
      %p171 = pnand %p169, %p170
      %p172 = pneg %p171
      // Predicated region
      $region9: #{tpu_custom_call.1} parent=5 // pred_check
        _
      $region10: #{tpu_custom_call.1} parent=5 // pred_check_branch
        %174 = sbr.rel (%p171) target = $region12
      $region11: #{tpu_custom_call.1} parent=5 // pred_region
        %s175 = ssub.s32 %s17, 1
        // Predicated region
        $region13: #{tpu_custom_call.1} parent=11 // pred_check
          %p176 = pneg %p81
        $region14: #{tpu_custom_call.1} parent=11 // pred_check_branch
          %178 = sbr.rel (%p176) target = $region16
        $region15: #{tpu_custom_call.1} parent=11 // pred_region
          %s180 = ssub.s32 9216, 9216
          %181 = vsyncadd [#allocation6], %s180
          %s182 = smul.addr %s26, 64
          %s183 = scalar_lea.hbm %s1, %s182
          %s184 = sshll.u32 [#allocation5], 4
          %s185 = int_to_ptr.vmem [resolvable:$true] %s184
          %190 = dma.hbm_to_vmem [thread:$0]  %s183, 9216, %s185, [#allocation6], 64, 64, 4
        $region16: #{tpu_custom_call.1} parent=11 // pred_fallthru
          _
        // Predicated region
        $region17: #{tpu_custom_call.1} parent=11 // pred_check
          %p191 = pneg %p107
        $region18: #{tpu_custom_call.1} parent=11 // pred_check_branch
          %193 = sbr.rel (%p191) target = $region20
        $region19: #{tpu_custom_call.1} parent=11 // pred_region
          %p194 = scmp.lt.s32.totalorder %s26, 0
          %s195 = scalar_select %p194, %s26, 0
          %s196 = scalar_lea.vmem %s2, %s195
        $region20: #{tpu_custom_call.1} parent=11 // pred_fallthru
          _
        // Predicated region
        $region21: #{tpu_custom_call.1} parent=11 // pred_check
          %p197 = pneg %p133
        $region22: #{tpu_custom_call.1} parent=11 // pred_check_branch
          %199 = sbr.rel (%p197) target = $region24
        $region23: #{tpu_custom_call.1} parent=11 // pred_region
          %p200 = scmp.lt.s32.totalorder %s26, 0
          %s201 = scalar_select %p200, %s26, 0
          %s202 = scalar_lea.vmem %s3, %s201
        $region24: #{tpu_custom_call.1} parent=11 // pred_fallthru
          _
      $region12: #{tpu_custom_call.1} parent=5 // pred_fallthru
        _
      %p203 = scmp.lt.s32.totalorder %s17, 4
      // Predicated region
      $region25: #{tpu_custom_call.1} parent=5 // pred_check
        %p204 = pneg %p203
      $region26: #{tpu_custom_call.1} parent=5 // pred_check_branch
        %206 = sbr.rel (%p204) target = $region28
      $region27: #{tpu_custom_call.1} parent=5 // pred_region
        // Predicated region
        $region29: #{tpu_custom_call.1} parent=27 // pred_check
          %p207 = pneg %p49
        $region30: #{tpu_custom_call.1} parent=27 // pred_check_branch
          %209 = sbr.rel (%p207) target = $region32
        $region31: #{tpu_custom_call.1} parent=27 // pred_region
          %s210 = sand.u32 %s39, 1
          %s211 = scalar_lea.sflag [#allocation3], %s210
          %s212 = sand.u32 %s39, 1
          %s213 = smul.addr %s212, 56
          %s214 = scalar_lea.vmem [#allocation2], %s213
          %s216 = ssub.s32 896, 896
          %217 = vsyncadd %s211, %s216
          %s218 = smul.addr %s25, 14
          %s219 = smul.addr %s218, 64
          %s220 = scalar_lea.hbm %s0, %s219
          %s221 = sshll.u32 %s214, 4
          %s222 = int_to_ptr.vmem [resolvable:$true] %s221
          %227 = dma.hbm_to_vmem [thread:$0]  %s220, 896, %s222, %s211, 64, 64, 4
        $region32: #{tpu_custom_call.1} parent=27 // pred_fallthru
          _
      $region28: #{tpu_custom_call.1} parent=5 // pred_fallthru
        _
      %p228 = scmp.le.s32.totalorder 1, %s17
      %p229 = scmp.lt.s32.totalorder %s17, 5
      %p230 = pnand %p228, %p229
      %p231 = pneg %p230
      // Predicated region
      $region33: #{tpu_custom_call.1} parent=5 // pred_check
        _
      $region34: #{tpu_custom_call.1} parent=5 // pred_check_branch
        %233 = sbr.rel (%p230) target = $region36
      $region35: #{tpu_custom_call.1} parent=5 // pred_region
        %s234 = ssub.s32 %s17, 1
        %s235 = sand.u32 %s42, 1
        %s236 = scalar_lea.sflag [#allocation3], %s235
        %s237 = sand.u32 %s42, 1
        %s238 = smul.addr %s237, 56
        %s239 = scalar_lea.vmem [#allocation2], %s238
        // Predicated region
        $region37: #{tpu_custom_call.1} parent=35 // pred_check
          %p240 = pneg %p55
        $region38: #{tpu_custom_call.1} parent=35 // pred_check_branch
          %242 = sbr.rel (%p240) target = $region40
        $region39: #{tpu_custom_call.1} parent=35 // pred_region
          %243 = dma.done %s236, 896
        $region40: #{tpu_custom_call.1} parent=35 // pred_fallthru
          _
        // Predicated region
        $region41: #{tpu_custom_call.1} parent=35 // pred_check
          %p244 = pneg %p81
        $region42: #{tpu_custom_call.1} parent=35 // pred_check_branch
          %246 = sbr.rel (%p244) target = $region44
        $region43: #{tpu_custom_call.1} parent=35 // pred_region
          %247 = dma.done [#allocation6], 9216
        $region44: #{tpu_custom_call.1} parent=35 // pred_fallthru
          _
        %s248 = sand.u32 %s42, 1
        %s249 = scalar_lea.sflag [#allocation3], %s248
        %s250 = sand.u32 %s42, 1
        %s251 = smul.addr %s250, 56
        %s252 = scalar_lea.vmem [#allocation2], %s251
        %p253 = pneg %p55
        %p254 = pneg %p52
        %p255 = pneg %p81
        %p256 = pneg %p78
        %p257 = scmp.lt.s32.totalorder %s26, 0
        %s258 = scalar_select %p257, %s26, 0
        %s259 = scalar_lea.vmem %s2, %s258
        %p260 = pneg %p107
        %p261 = pneg %p104
        %p262 = scmp.lt.s32.totalorder %s26, 0
        %s263 = scalar_select %p262, %s26, 0
        %s264 = scalar_lea.vmem %s3, %s263
        %p265 = pneg %p133
        %p266 = pneg %p130
        %p267 = pneg %p161
        %p268 = pneg %p158
        %s269 = sand.u32 %s148, 1
        %s270 = scalar_lea.sflag [#allocation4], %s269
        %s271 = sand.u32 %s148, 1
        %s272 = smul.addr %s271, 40
        %s273 = scalar_lea.vmem [#allocation7], %s272
        %p274 = scmp.lt.s32.totalorder %s26, 0
        %s275 = scalar_select %p274, %s26, 0
        %s276 = scalar_lea.vmem %s2, %s275
        %p277 = scmp.lt.s32.totalorder %s26, 0
        %s278 = scalar_select %p277, %s26, 0
        %s279 = scalar_lea.vmem %s3, %s278
        %v281 = vld [vmem:[%s239] sm:$0x8]
        %v282 = vld [vmem:[%s239 + $0x4] sm:$0xf]
        %v283 = vld [vmem:[%s239 + $0x8] sm:$0xf]
        %v284 = vld [vmem:[%s239 + $0xc] sm:$0xf]
        %v285 = vld [vmem:[%s239 + $0x10] sm:$0xf]
        %v286 = vld [vmem:[%s239 + $0x14] sm:$0xf]
        %v287 = vld [vmem:[%s239 + $0x18] sm:$0xf]
        %v288 = vld [vmem:[%s239 + $0x1c] sm:$0xf]
        %v289 = vld [vmem:[%s239 + $0x20] sm:$0xf]
        %v290 = vld [vmem:[%s239 + $0x24] sm:$0xf]
        %v291 = vld [vmem:[%s239 + $0x28] sm:$0xf]
        %v292 = vld [vmem:[#allocation5] sm:$0xf]
        %v293 = vld [vmem:[#allocation5 + $0x4] sm:$0xf]
        %v294 = vld [vmem:[#allocation5 + $0x8] sm:$0xf]
        %v295 = vld [vmem:[#allocation5 + $0xc] sm:$0xf]
        %v296 = vld [vmem:[#allocation5 + $0x10] sm:$0xf]
        %v297 = vld [vmem:[#allocation5 + $0x14] sm:$0xf]
        %v298 = vld [vmem:[#allocation5 + $0x18] sm:$0xf]
        %v299 = vld [vmem:[#allocation5 + $0x1c] sm:$0xf]
        %v300 = vld [vmem:[#allocation5 + $0x20] sm:$0xf]
        %v301 = vld [vmem:[#allocation5 + $0x24] sm:$0xf]
        %v302 = vld [vmem:[#allocation5 + $0x28] sm:$0xf]
        %v303 = vld [vmem:[#allocation5 + $0x2c] sm:$0xf]
        %v304 = vld [vmem:[#allocation5 + $0x30] sm:$0xf]
        %v305 = vld [vmem:[#allocation5 + $0x34] sm:$0xf]
        %v306 = vld [vmem:[#allocation5 + $0x38] sm:$0xf]
        %v307 = vld [vmem:[#allocation5 + $0x3c] sm:$0xf]
        %v308 = vld [vmem:[#allocation5 + $0x40] sm:$0xf]
        %v309 = vld [vmem:[#allocation5 + $0x44] sm:$0xf]
        %v310 = vld [vmem:[#allocation5 + $0x48] sm:$0xf]
        %v311 = vld [vmem:[#allocation5 + $0x4c] sm:$0xf]
        %v312 = vld [vmem:[#allocation5 + $0x50] sm:$0xf]
        %v313 = vld [vmem:[#allocation5 + $0x54] sm:$0xf]
        %v314 = vld [vmem:[#allocation5 + $0x58] sm:$0xf]
        %v315 = vld [vmem:[#allocation5 + $0x5c] sm:$0xf]
        %v316 = vld [vmem:[#allocation5 + $0x60] sm:$0xf]
        %v317 = vld [vmem:[#allocation5 + $0x64] sm:$0xf]
        %v318 = vld [vmem:[#allocation5 + $0x68] sm:$0xf]
        %v319 = vld [vmem:[#allocation5 + $0x6c] sm:$0xf]
        %v320 = vld [vmem:[#allocation5 + $0x70] sm:$0xf]
        %v321 = vld [vmem:[#allocation5 + $0x74] sm:$0xf]
        %v322 = vld [vmem:[#allocation5 + $0x78] sm:$0xf]
        %v323 = vld [vmem:[#allocation5 + $0x7c] sm:$0xf]
        %v334 = vunpack.c.l.b16 %v282
        %v335 = vunpack.c.l.b16 %v283
        %v336 = vunpack.c.l.b16 %v284
        %v337 = vunpack.c.l.b16 %v285
        %v338 = vunpack.c.l.b16 %v286
        %v339 = vunpack.c.l.b16 %v287
        %v340 = vunpack.c.l.b16 %v288
        %v341 = vunpack.c.l.b16 %v289
        %v342 = vunpack.c.l.b16 %v290
        %v343 = vunpack.c.l.b16 %v291
        %v344 = vpack.c.b16 %v335, %v334
        %v345 = vpack.c.b16 %v337, %v336
        %v346 = vpack.c.b16 %v339, %v338
        %v347 = vpack.c.b16 %v341, %v340
        %v348 = vpack.c.b16 %v343, %v342
        %v370 = vunpack.c.l.b16 %v308
        %v371 = vunpack.c.l.b16 %v309
        %v372 = vunpack.c.l.b16 %v310
        %v373 = vunpack.c.l.b16 %v311
        %v374 = vunpack.c.l.b16 %v312
        %v375 = vunpack.c.l.b16 %v313
        %v376 = vunpack.c.l.b16 %v314
        %v377 = vunpack.c.l.b16 %v315
        %v378 = vunpack.c.l.b16 %v316
        %v379 = vunpack.c.l.b16 %v317
        %v380 = vunpack.c.l.b16 %v318
        %v381 = vunpack.c.l.b16 %v319
        %v382 = vunpack.c.l.b16 %v320
        %v383 = vunpack.c.l.b16 %v321
        %v384 = vunpack.c.l.b16 %v322
        %v385 = vunpack.c.l.b16 %v323
        %v386 = vpack.c.b16 %v371, %v370
        %v387 = vpack.c.b16 %v373, %v372
        %v388 = vpack.c.b16 %v375, %v374
        %v389 = vpack.c.b16 %v377, %v376
        %v390 = vpack.c.b16 %v379, %v378
        %v391 = vpack.c.b16 %v381, %v380
        %v392 = vpack.c.b16 %v383, %v382
        %v393 = vpack.c.b16 %v385, %v384
        %402 = vmatprep.subr.bf16.mxu0 0
        %403 = vmatpush1.bf16.msra.mxu0 %v386
        %404 = vmatprep.subr.bf16.mxu0 0
        %405 = vmatpush1.bf16.msra.mxu0 %v387
        %406 = vmatprep.subr.bf16.mxu0 0
        %407 = vmatpush1.bf16.msra.mxu0 %v388
        %408 = vmatprep.subr.bf16.mxu0 0
        %409 = vmatpush1.bf16.msra.mxu0 %v389
        %410 = vmatprep.subr.bf16.mxu0 0
        %411 = vmatpush1.bf16.msra.mxu0 %v390
        %412 = vmatprep.subr.bf16.mxu0 0
        %413 = vmatpush1.bf16.msra.mxu0 %v391
        %414 = vmatprep.subr.bf16.mxu0 0
        %415 = vmatpush1.bf16.msra.mxu0 %v392
        %416 = vmatprep.subr.bf16.mxu0 0
        %417 = vmatpush1.bf16.msra.mxu0 %v393
        %418 = vmatprep.subr.bf16.mxu0 0
        %419 = vmatpush1.bf16.msra.mxu0 0
        %420 = vmatprep.subr.bf16.mxu0 0
        %421 = vmatpush1.bf16.msra.mxu0 0
        %422 = vmatprep.subr.bf16.mxu0 0
        %423 = vmatpush1.bf16.msra.mxu0 0
        %424 = vmatprep.subr.bf16.mxu0 0
        %425 = vmatpush1.bf16.msra.mxu0 0
        %426 = vmatprep.subr.bf16.mxu0 0
        %427 = vmatpush1.bf16.msra.mxu0 0
        %428 = vmatprep.subr.bf16.mxu0 0
        %429 = vmatpush1.bf16.msra.mxu0 0
        %430 = vmatprep.subr.bf16.mxu0 0
        %431 = vmatpush1.bf16.msra.mxu0 0
        %432 = vmatprep.subr.bf16.mxu0 0
        %433 = vmatpush1.bf16.msra.mxu0 0
        %434 = vmatprep.mubr.bf16.mxu0 0
        %435 = vmatmul.mubr.bf16.gmra.mrb[0].mxu0 %v344
        %v436 = vpop.f32.mrb[0].mxu0
        %v437 = vadd.f32 0.0, %v436
        %v438 = vpop.f32.mrb[0].mxu0
        %v439 = vpop.f32.mrb[0].mxu0
        %v440 = vadd.f32 0.0, %v439
        %v441 = vpop.f32.mrb[0].mxu0
        %442 = vmatprep.mubr.bf16.mxu0 0
        %443 = vmatmul.mubr.bf16.gmra.mrb[0].mxu0 %v345
        %v444 = vpop.f32.mrb[0].mxu0
        %v445 = vadd.f32 0.0, %v444
        %v446 = vpop.f32.mrb[0].mxu0
        %v447 = vpop.f32.mrb[0].mxu0
        %v448 = vadd.f32 0.0, %v447
        %v449 = vpop.f32.mrb[0].mxu0
        %450 = vmatprep.mubr.bf16.mxu0 0
        %451 = vmatmul.mubr.bf16.gmra.mrb[0].mxu0 %v346
        %v452 = vpop.f32.mrb[0].mxu0
        %v453 = vadd.f32 0.0, %v452
        %v454 = vpop.f32.mrb[0].mxu0
        %v455 = vpop.f32.mrb[0].mxu0
        %v456 = vadd.f32 0.0, %v455
        %v457 = vpop.f32.mrb[0].mxu0
        %458 = vmatprep.mubr.bf16.mxu0 0
        %459 = vmatmul.mubr.bf16.gmra.mrb[0].mxu0 %v347
        %v460 = vpop.f32.mrb[0].mxu0
        %v461 = vadd.f32 0.0, %v460
        %v462 = vpop.f32.mrb[0].mxu0
        %v463 = vpop.f32.mrb[0].mxu0
        %v464 = vadd.f32 0.0, %v463
        %v465 = vpop.f32.mrb[0].mxu0
        %466 = vmatprep.mubr.bf16.mxu0 0
        %467 = vmatmul.mubr.bf16.gmra.mrb[0].mxu0 %v348
        %v468 = vpop.f32.mrb[0].mxu0
        %v469 = vadd.f32 0.0, %v468
        %v470 = vpop.f32.mrb[0].mxu0
        %v471 = vpop.f32.mrb[0].mxu0
        %v472 = vadd.f32 0.0, %v471
        %v473 = vpop.f32.mrb[0].mxu0
        %474 = vdwg.mxu0
        %v476 = vunpack.c.l.b16 %v281
        %v477 = vpack.c.b16 %v334, %v476
        %v478 = vpack.c.b16 %v336, %v335
        %v479 = vpack.c.b16 %v338, %v337
        %v480 = vpack.c.b16 %v340, %v339
        %v481 = vpack.c.b16 %v342, %v341
        %v482 = vpack.c.b16 %v343, %v343
        %vm483 = vsmask.f32 4352
        %v485 = vshrl.u32 %v477, 16
        %v487 = vrot.slane %v485, 3
        %v488 = vshll.u32 %v477, 16
        %v490 = vrot.slane %v488, 4
        %v491 = vor.u32 %v487, %v490
        %v493 = vshrl.u32 %v478, 16
        %v495 = vrot.slane %v493, 3
        %v496 = vshll.u32 %v478, 16
        %v498 = vrot.slane %v496, 4
        %v499 = vor.u32 %v495, %v498
        %v500 = vsel %vm483, %v491, %v499
        %v502 = vshrl.u32 %v479, 16
        %v504 = vrot.slane %v502, 3
        %v505 = vshll.u32 %v479, 16
        %v507 = vrot.slane %v505, 4
        %v508 = vor.u32 %v504, %v507
        %v509 = vsel %vm483, %v499, %v508
        %v511 = vshrl.u32 %v480, 16
        %v513 = vrot.slane %v511, 3
        %v514 = vshll.u32 %v480, 16
        %v516 = vrot.slane %v514, 4
        %v517 = vor.u32 %v513, %v516
        %v518 = vsel %vm483, %v508, %v517
        %v520 = vshrl.u32 %v481, 16
        %v522 = vrot.slane %v520, 3
        %v523 = vshll.u32 %v481, 16
        %v525 = vrot.slane %v523, 4
        %v526 = vor.u32 %v522, %v525
        %v527 = vsel %vm483, %v517, %v526
        %v529 = vshrl.u32 %v482, 16
        %v531 = vrot.slane %v529, 3
        %v532 = vshll.u32 %v482, 16
        %v534 = vrot.slane %v532, 4
        %v535 = vor.u32 %v531, %v534
        %v536 = vsel %vm483, %v526, %v535
        %v558 = vunpack.c.l.b16 %v292
        %v559 = vunpack.c.l.b16 %v293
        %v560 = vunpack.c.l.b16 %v294
        %v561 = vunpack.c.l.b16 %v295
        %v562 = vunpack.c.l.b16 %v296
        %v563 = vunpack.c.l.b16 %v297
        %v564 = vunpack.c.l.b16 %v298
        %v565 = vunpack.c.l.b16 %v299
        %v566 = vunpack.c.l.b16 %v300
        %v567 = vunpack.c.l.b16 %v301
        %v568 = vunpack.c.l.b16 %v302
        %v569 = vunpack.c.l.b16 %v303
        %v570 = vunpack.c.l.b16 %v304
        %v571 = vunpack.c.l.b16 %v305
        %v572 = vunpack.c.l.b16 %v306
        %v573 = vunpack.c.l.b16 %v307
        %v574 = vpack.c.b16 %v559, %v558
        %v575 = vpack.c.b16 %v561, %v560
        %v576 = vpack.c.b16 %v563, %v562
        %v577 = vpack.c.b16 %v565, %v564
        %v578 = vpack.c.b16 %v567, %v566
        %v579 = vpack.c.b16 %v569, %v568
        %v580 = vpack.c.b16 %v571, %v570
        %v581 = vpack.c.b16 %v573, %v572
        %590 = vmatprep.subr.bf16.mxu0 0
        %591 = vmatpush1.bf16.msra.mxu0 %v574
        %592 = vmatprep.subr.bf16.mxu0 0
        %593 = vmatpush1.bf16.msra.mxu0 %v575
        %594 = vmatprep.subr.bf16.mxu0 0
        %595 = vmatpush1.bf16.msra.mxu0 %v576
        %596 = vmatprep.subr.bf16.mxu0 0
        %597 = vmatpush1.bf16.msra.mxu0 %v577
        %598 = vmatprep.subr.bf16.mxu0 0
        %599 = vmatpush1.bf16.msra.mxu0 %v578
        %600 = vmatprep.subr.bf16.mxu0 0
        %601 = vmatpush1.bf16.msra.mxu0 %v579
        %602 = vmatprep.subr.bf16.mxu0 0
        %603 = vmatpush1.bf16.msra.mxu0 %v580
        %604 = vmatprep.subr.bf16.mxu0 0
        %605 = vmatpush1.bf16.msra.mxu0 %v581
        %606 = vmatprep.subr.bf16.mxu0 0
        %607 = vmatpush1.bf16.msra.mxu0 0
        %608 = vmatprep.subr.bf16.mxu0 0
        %609 = vmatpush1.bf16.msra.mxu0 0
        %610 = vmatprep.subr.bf16.mxu0 0
        %611 = vmatpush1.bf16.msra.mxu0 0
        %612 = vmatprep.subr.bf16.mxu0 0
        %613 = vmatpush1.bf16.msra.mxu0 0
        %614 = vmatprep.subr.bf16.mxu0 0
        %615 = vmatpush1.bf16.msra.mxu0 0
        %616 = vmatprep.subr.bf16.mxu0 0
        %617 = vmatpush1.bf16.msra.mxu0 0
        %618 = vmatprep.subr.bf16.mxu0 0
        %619 = vmatpush1.bf16.msra.mxu0 0
        %620 = vmatprep.subr.bf16.mxu0 0
        %621 = vmatpush1.bf16.msra.mxu0 0
        %622 = vmatprep.mubr.bf16.mxu0 0
        %623 = vmatmul.mubr.bf16.gmra.mrb[0].mxu0 %v500
        %v624 = vpop.f32.mrb[0].mxu0
        %v625 = vadd.f32 %v437, %v624
        %v626 = vpop.f32.mrb[0].mxu0
        %v627 = vpop.f32.mrb[0].mxu0
        %v628 = vadd.f32 %v440, %v627
        %v629 = vpop.f32.mrb[0].mxu0
        %630 = vmatprep.mubr.bf16.mxu0 0
        %631 = vmatmul.mubr.bf16.gmra.mrb[0].mxu0 %v509
        %v632 = vpop.f32.mrb[0].mxu0
        %v633 = vadd.f32 %v445, %v632
        %v634 = vpop.f32.mrb[0].mxu0
        %v635 = vpop.f32.mrb[0].mxu0
        %v636 = vadd.f32 %v448, %v635
        %v637 = vpop.f32.mrb[0].mxu0
        %638 = vmatprep.mubr.bf16.mxu0 0
        %639 = vmatmul.mubr.bf16.gmra.mrb[0].mxu0 %v518
        %v640 = vpop.f32.mrb[0].mxu0
        %v641 = vadd.f32 %v453, %v640
        %v642 = vpop.f32.mrb[0].mxu0
        %v643 = vpop.f32.mrb[0].mxu0
        %v644 = vadd.f32 %v456, %v643
        %v645 = vpop.f32.mrb[0].mxu0
        %646 = vmatprep.mubr.bf16.mxu0 0
        %647 = vmatmul.mubr.bf16.gmra.mrb[0].mxu0 %v527
        %v648 = vpop.f32.mrb[0].mxu0
        %v649 = vadd.f32 %v461, %v648
        %v650 = vpop.f32.mrb[0].mxu0
        %v651 = vpop.f32.mrb[0].mxu0
        %v652 = vadd.f32 %v464, %v651
        %v653 = vpop.f32.mrb[0].mxu0
        %654 = vmatprep.mubr.bf16.mxu0 0
        %655 = vmatmul.mubr.bf16.gmra.mrb[0].mxu0 %v536
        %v656 = vpop.f32.mrb[0].mxu0
        %v657 = vadd.f32 %v469, %v656
        %v658 = vpop.f32.mrb[0].mxu0
        %v659 = vpop.f32.mrb[0].mxu0
        %v660 = vadd.f32 %v472, %v659
        %v661 = vpop.f32.mrb[0].mxu0
        %662 = vdwg.mxu0
        %v663 = vld [vmem:[%s239 + $0x4] sm:$0xf]
        %v664 = vld [vmem:[%s239 + $0x8] sm:$0xf]
        %v665 = vld [vmem:[%s239 + $0xc] sm:$0xf]
        %v666 = vld [vmem:[%s239 + $0x10] sm:$0xf]
        %v667 = vld [vmem:[%s239 + $0x14] sm:$0xf]
        %v668 = vld [vmem:[%s239 + $0x18] sm:$0xf]
        %v669 = vld [vmem:[%s239 + $0x1c] sm:$0xf]
        %v670 = vld [vmem:[%s239 + $0x20] sm:$0xf]
        %v671 = vld [vmem:[%s239 + $0x24] sm:$0xf]
        %v672 = vld [vmem:[%s239 + $0x28] sm:$0xf]
        %v673 = vld [vmem:[%s239 + $0x2c] sm:$0x1]
        %v674 = vld [vmem:[#allocation5 + $0x80] sm:$0xf]
        %v675 = vld [vmem:[#allocation5 + $0x84] sm:$0xf]
        %v676 = vld [vmem:[#allocation5 + $0x88] sm:$0xf]
        %v677 = vld [vmem:[#allocation5 + $0x8c] sm:$0xf]
        %v678 = vld [vmem:[#allocation5 + $0x90] sm:$0xf]
        %v679 = vld [vmem:[#allocation5 + $0x94] sm:$0xf]
        %v680 = vld [vmem:[#allocation5 + $0x98] sm:$0xf]
        %v681 = vld [vmem:[#allocation5 + $0x9c] sm:$0xf]
        %v682 = vld [vmem:[#allocation5 + $0xa0] sm:$0xf]
        %v683 = vld [vmem:[#allocation5 + $0xa4] sm:$0xf]
        %v684 = vld [vmem:[#allocation5 + $0xa8] sm:$0xf]
        %v685 = vld [vmem:[#allocation5 + $0xac] sm:$0xf]
        %v686 = vld [vmem:[#allocation5 + $0xb0] sm:$0xf]
        %v687 = vld [vmem:[#allocation5 + $0xb4] sm:$0xf]
        %v688 = vld [vmem:[#allocation5 + $0xb8] sm:$0xf]
        %v689 = vld [vmem:[#allocation5 + $0xbc] sm:$0xf]
        %v701 = vunpack.c.l.b16 %v663
        %v702 = vunpack.c.l.b16 %v664
        %v703 = vunpack.c.l.b16 %v665
        %v704 = vunpack.c.l.b16 %v666
        %v705 = vunpack.c.l.b16 %v667
        %v706 = vunpack.c.l.b16 %v668
        %v707 = vunpack.c.l.b16 %v669
        %v708 = vunpack.c.l.b16 %v670
        %v709 = vunpack.c.l.b16 %v671
        %v710 = vunpack.c.l.b16 %v672
        %v711 = vunpack.c.l.b16 %v673
        %v712 = vpack.c.b16 %v702, %v701
        %v713 = vpack.c.b16 %v704, %v703
        %v714 = vpack.c.b16 %v706, %v705
        %v715 = vpack.c.b16 %v708, %v707
        %v716 = vpack.c.b16 %v710, %v709
        %v717 = vpack.c.b16 %v711, %v711
        %vm718 = vsmask.f32 7424
        %v720 = vshrl.u32 %v712, 16
        %v722 = vshll.u32 %v712, 16
        %v724 = vrot.slane %v722, 1
        %v725 = vor.u32 %v720, %v724
        %v727 = vshll.u32 %v713, 16
        %v729 = vrot.slane %v727, 1
        %v730 = vsel %vm718, %v725, %v729
        %v731 = vshrl.u32 %v713, 16
        %v733 = vor.u32 %v731, %v729
        %v735 = vshll.u32 %v714, 16
        %v737 = vrot.slane %v735, 1
        %v738 = vsel %vm718, %v733, %v737
        %v739 = vshrl.u32 %v714, 16
        %v741 = vor.u32 %v739, %v737
        %v743 = vshll.u32 %v715, 16
        %v745 = vrot.slane %v743, 1
        %v746 = vsel %vm718, %v741, %v745
        %v747 = vshrl.u32 %v715, 16
        %v749 = vor.u32 %v747, %v745
        %v751 = vshll.u32 %v716, 16
        %v753 = vrot.slane %v751, 1
        %v754 = vsel %vm718, %v749, %v753
        %v755 = vshrl.u32 %v716, 16
        %v757 = vor.u32 %v755, %v753
        %v759 = vshll.u32 %v717, 16
        %v761 = vrot.slane %v759, 1
        %v762 = vsel %vm718, %v757, %v761
        %v784 = vunpack.c.l.b16 %v674
        %v785 = vunpack.c.l.b16 %v675
        %v786 = vunpack.c.l.b16 %v676
        %v787 = vunpack.c.l.b16 %v677
        %v788 = vunpack.c.l.b16 %v678
        %v789 = vunpack.c.l.b16 %v679
        %v790 = vunpack.c.l.b16 %v680
        %v791 = vunpack.c.l.b16 %v681
        %v792 = vunpack.c.l.b16 %v682
        %v793 = vunpack.c.l.b16 %v683
        %v794 = vunpack.c.l.b16 %v684
        %v795 = vunpack.c.l.b16 %v685
        %v796 = vunpack.c.l.b16 %v686
        %v797 = vunpack.c.l.b16 %v687
        %v798 = vunpack.c.l.b16 %v688
        %v799 = vunpack.c.l.b16 %v689
        %v800 = vpack.c.b16 %v785, %v784
        %v801 = vpack.c.b16 %v787, %v786
        %v802 = vpack.c.b16 %v789, %v788
        %v803 = vpack.c.b16 %v791, %v790
        %v804 = vpack.c.b16 %v793, %v792
        %v805 = vpack.c.b16 %v795, %v794
        %v806 = vpack.c.b16 %v797, %v796
        %v807 = vpack.c.b16 %v799, %v798
        %816 = vmatprep.subr.bf16.mxu0 0
        %817 = vmatpush1.bf16.msra.mxu0 %v800
        %818 = vmatprep.subr.bf16.mxu0 0
        %819 = vmatpush1.bf16.msra.mxu0 %v801
        %820 = vmatprep.subr.bf16.mxu0 0
        %821 = vmatpush1.bf16.msra.mxu0 %v802
        %822 = vmatprep.subr.bf16.mxu0 0
        %823 = vmatpush1.bf16.msra.mxu0 %v803
        %824 = vmatprep.subr.bf16.mxu0 0
        %825 = vmatpush1.bf16.msra.mxu0 %v804
        %826 = vmatprep.subr.bf16.mxu0 0
        %827 = vmatpush1.bf16.msra.mxu0 %v805
        %828 = vmatprep.subr.bf16.mxu0 0
        %829 = vmatpush1.bf16.msra.mxu0 %v806
        %830 = vmatprep.subr.bf16.mxu0 0
        %831 = vmatpush1.bf16.msra.mxu0 %v807
        %832 = vmatprep.subr.bf16.mxu0 0
        %833 = vmatpush1.bf16.msra.mxu0 0
        %834 = vmatprep.subr.bf16.mxu0 0
        %835 = vmatpush1.bf16.msra.mxu0 0
        %836 = vmatprep.subr.bf16.mxu0 0
        %837 = vmatpush1.bf16.msra.mxu0 0
        %838 = vmatprep.subr.bf16.mxu0 0
        %839 = vmatpush1.bf16.msra.mxu0 0
        %840 = vmatprep.subr.bf16.mxu0 0
        %841 = vmatpush1.bf16.msra.mxu0 0
        %842 = vmatprep.subr.bf16.mxu0 0
        %843 = vmatpush1.bf16.msra.mxu0 0
        %844 = vmatprep.subr.bf16.mxu0 0
        %845 = vmatpush1.bf16.msra.mxu0 0
        %846 = vmatprep.subr.bf16.mxu0 0
        %847 = vmatpush1.bf16.msra.mxu0 0
        %848 = vmatprep.mubr.bf16.mxu0 0
        %849 = vmatmul.mubr.bf16.gmra.mrb[0].mxu0 %v730
        %v850 = vpop.f32.mrb[0].mxu0
        %v851 = vadd.f32 0.0, %v850
        %v852 = vpop.f32.mrb[0].mxu0
        %v853 = vpop.f32.mrb[0].mxu0
        %v854 = vadd.f32 0.0, %v853
        %v855 = vpop.f32.mrb[0].mxu0
        %856 = vmatprep.mubr.bf16.mxu0 0
        %857 = vmatmul.mubr.bf16.gmra.mrb[0].mxu0 %v738
        %v858 = vpop.f32.mrb[0].mxu0
        %v859 = vadd.f32 0.0, %v858
        %v860 = vpop.f32.mrb[0].mxu0
        %v861 = vpop.f32.mrb[0].mxu0
        %v862 = vadd.f32 0.0, %v861
        %v863 = vpop.f32.mrb[0].mxu0
        %864 = vmatprep.mubr.bf16.mxu0 0
        %865 = vmatmul.mubr.bf16.gmra.mrb[0].mxu0 %v746
        %v866 = vpop.f32.mrb[0].mxu0
        %v867 = vadd.f32 0.0, %v866
        %v868 = vpop.f32.mrb[0].mxu0
        %v869 = vpop.f32.mrb[0].mxu0
        %v870 = vadd.f32 0.0, %v869
        %v871 = vpop.f32.mrb[0].mxu0
        %872 = vmatprep.mubr.bf16.mxu0 0
        %873 = vmatmul.mubr.bf16.gmra.mrb[0].mxu0 %v754
        %v874 = vpop.f32.mrb[0].mxu0
        %v875 = vadd.f32 0.0, %v874
        %v876 = vpop.f32.mrb[0].mxu0
        %v877 = vpop.f32.mrb[0].mxu0
        %v878 = vadd.f32 0.0, %v877
        %v879 = vpop.f32.mrb[0].mxu0
        %880 = vmatprep.mubr.bf16.mxu0 0
        %881 = vmatmul.mubr.bf16.gmra.mrb[0].mxu0 %v762
        %v882 = vpop.f32.mrb[0].mxu0
        %v883 = vadd.f32 0.0, %v882
        %v884 = vpop.f32.mrb[0].mxu0
        %v885 = vpop.f32.mrb[0].mxu0
        %v886 = vadd.f32 0.0, %v885
        %v887 = vpop.f32.mrb[0].mxu0
        %888 = vdwg.mxu0
        %v889 = vadd.f32 %v625, %v851
        %v890 = vadd.f32 %v628, %v854
        %v891 = vadd.f32 %v633, %v859
        %v892 = vadd.f32 %v636, %v862
        %v893 = vadd.f32 %v641, %v867
        %v894 = vadd.f32 %v644, %v870
        %v895 = vadd.f32 %v649, %v875
        %v896 = vadd.f32 %v652, %v878
        %v897 = vadd.f32 %v657, %v883
        %v898 = vadd.f32 %v660, %v886
        %v899 = vld [vmem:[%s239 + $0x8] sm:$0xf]
        %v900 = vld [vmem:[%s239 + $0xc] sm:$0xf]
        %v901 = vld [vmem:[%s239 + $0x10] sm:$0xf]
        %v902 = vld [vmem:[%s239 + $0x14] sm:$0xf]
        %v903 = vld [vmem:[%s239 + $0x18] sm:$0xf]
        %v904 = vld [vmem:[%s239 + $0x1c] sm:$0xf]
        %v905 = vld [vmem:[%s239 + $0x20] sm:$0xf]
        %v906 = vld [vmem:[%s239 + $0x24] sm:$0xf]
        %v907 = vld [vmem:[%s239 + $0x28] sm:$0xf]
        %v908 = vld [vmem:[%s239 + $0x2c] sm:$0xf]
        %v909 = vld [vmem:[%s239 + $0x30] sm:$0x1]
        %v910 = vld [vmem:[#allocation5 + $0xc0] sm:$0xf]
        %v911 = vld [vmem:[#allocation5 + $0xc4] sm:$0xf]
        %v912 = vld [vmem:[#allocation5 + $0xc8] sm:$0xf]
        %v913 = vld [vmem:[#allocation5 + $0xcc] sm:$0xf]
        %v914 = vld [vmem:[#allocation5 + $0xd0] sm:$0xf]
        %v915 = vld [vmem:[#allocation5 + $0xd4] sm:$0xf]
        %v916 = vld [vmem:[#allocation5 + $0xd8] sm:$0xf]
        %v917 = vld [vmem:[#allocation5 + $0xdc] sm:$0xf]
        %v918 = vld [vmem:[#allocation5 + $0xe0] sm:$0xf]
        %v919 = vld [vmem:[#allocation5 + $0xe4] sm:$0xf]
        %v920 = vld [vmem:[#allocation5 + $0xe8] sm:$0xf]
        %v921 = vld [vmem:[#allocation5 + $0xec] sm:$0xf]
        %v922 = vld [vmem:[#allocation5 + $0xf0] sm:$0xf]
        %v923 = vld [vmem:[#allocation5 + $0xf4] sm:$0xf]
        %v924 = vld [vmem:[#allocation5 + $0xf8] sm:$0xf]
        %v925 = vld [vmem:[#allocation5 + $0xfc] sm:$0xf]
        %v937 = vunpack.c.l.b16 %v899
        %v938 = vunpack.c.l.b16 %v900
        %v939 = vunpack.c.l.b16 %v901
        %v940 = vunpack.c.l.b16 %v902
        %v941 = vunpack.c.l.b16 %v903
        %v942 = vunpack.c.l.b16 %v904
        %v943 = vunpack.c.l.b16 %v905
        %v944 = vunpack.c.l.b16 %v906
        %v945 = vunpack.c.l.b16 %v907
        %v946 = vunpack.c.l.b16 %v908
        %v947 = vunpack.c.l.b16 %v909
        %v948 = vpack.c.b16 %v938, %v937
        %v949 = vpack.c.b16 %v940, %v939
        %v950 = vpack.c.b16 %v942, %v941
        %v951 = vpack.c.b16 %v944, %v943
        %v952 = vpack.c.b16 %v946, %v945
        %v953 = vpack.c.b16 %v947, %v947
        %v955 = vshrl.u32 %v948, 16
        %v957 = vshll.u32 %v948, 16
        %v959 = vrot.slane %v957, 1
        %v960 = vor.u32 %v955, %v959
        %v962 = vshll.u32 %v949, 16
        %v964 = vrot.slane %v962, 1
        %v965 = vsel %vm718, %v960, %v964
        %v966 = vshrl.u32 %v949, 16
        %v968 = vor.u32 %v966, %v964
        %v970 = vshll.u32 %v950, 16
        %v972 = vrot.slane %v970, 1
        %v973 = vsel %vm718, %v968, %v972
        %v974 = vshrl.u32 %v950, 16
        %v976 = vor.u32 %v974, %v972
        %v978 = vshll.u32 %v951, 16
        %v980 = vrot.slane %v978, 1
        %v981 = vsel %vm718, %v976, %v980
        %v982 = vshrl.u32 %v951, 16
        %v984 = vor.u32 %v982, %v980
        %v986 = vshll.u32 %v952, 16
        %v988 = vrot.slane %v986, 1
        %v989 = vsel %vm718, %v984, %v988
        %v990 = vshrl.u32 %v952, 16
        %v992 = vor.u32 %v990, %v988
        %v994 = vshll.u32 %v953, 16
        %v996 = vrot.slane %v994, 1
        %v997 = vsel %vm718, %v992, %v996
        %v1019 = vunpack.c.l.b16 %v910
        %v1020 = vunpack.c.l.b16 %v911
        %v1021 = vunpack.c.l.b16 %v912
        %v1022 = vunpack.c.l.b16 %v913
        %v1023 = vunpack.c.l.b16 %v914
        %v1024 = vunpack.c.l.b16 %v915
        %v1025 = vunpack.c.l.b16 %v916
        %v1026 = vunpack.c.l.b16 %v917
        %v1027 = vunpack.c.l.b16 %v918
        %v1028 = vunpack.c.l.b16 %v919
        %v1029 = vunpack.c.l.b16 %v920
        %v1030 = vunpack.c.l.b16 %v921
        %v1031 = vunpack.c.l.b16 %v922
        %v1032 = vunpack.c.l.b16 %v923
        %v1033 = vunpack.c.l.b16 %v924
        %v1034 = vunpack.c.l.b16 %v925
        %v1035 = vpack.c.b16 %v1020, %v1019
        %v1036 = vpack.c.b16 %v1022, %v1021
        %v1037 = vpack.c.b16 %v1024, %v1023
        %v1038 = vpack.c.b16 %v1026, %v1025
        %v1039 = vpack.c.b16 %v1028, %v1027
        %v1040 = vpack.c.b16 %v1030, %v1029
        %v1041 = vpack.c.b16 %v1032, %v1031
        %v1042 = vpack.c.b16 %v1034, %v1033
        %1051 = vmatprep.subr.bf16.mxu0 0
        %1052 = vmatpush1.bf16.msra.mxu0 %v1035
        %1053 = vmatprep.subr.bf16.mxu0 0
        %1054 = vmatpush1.bf16.msra.mxu0 %v1036
        %1055 = vmatprep.subr.bf16.mxu0 0
        %1056 = vmatpush1.bf16.msra.mxu0 %v1037
        %1057 = vmatprep.subr.bf16.mxu0 0
        %1058 = vmatpush1.bf16.msra.mxu0 %v1038
        %1059 = vmatprep.subr.bf16.mxu0 0
        %1060 = vmatpush1.bf16.msra.mxu0 %v1039
        %1061 = vmatprep.subr.bf16.mxu0 0
        %1062 = vmatpush1.bf16.msra.mxu0 %v1040
        %1063 = vmatprep.subr.bf16.mxu0 0
        %1064 = vmatpush1.bf16.msra.mxu0 %v1041
        %1065 = vmatprep.subr.bf16.mxu0 0
        %1066 = vmatpush1.bf16.msra.mxu0 %v1042
        %1067 = vmatprep.subr.bf16.mxu0 0
        %1068 = vmatpush1.bf16.msra.mxu0 0
        %1069 = vmatprep.subr.bf16.mxu0 0
        %1070 = vmatpush1.bf16.msra.mxu0 0
        %1071 = vmatprep.subr.bf16.mxu0 0
        %1072 = vmatpush1.bf16.msra.mxu0 0
        %1073 = vmatprep.subr.bf16.mxu0 0
        %1074 = vmatpush1.bf16.msra.mxu0 0
        %1075 = vmatprep.subr.bf16.mxu0 0
        %1076 = vmatpush1.bf16.msra.mxu0 0
        %1077 = vmatprep.subr.bf16.mxu0 0
        %1078 = vmatpush1.bf16.msra.mxu0 0
        %1079 = vmatprep.subr.bf16.mxu0 0
        %1080 = vmatpush1.bf16.msra.mxu0 0
        %1081 = vmatprep.subr.bf16.mxu0 0
        %1082 = vmatpush1.bf16.msra.mxu0 0
        %1083 = vmatprep.mubr.bf16.mxu0 0
        %1084 = vmatmul.mubr.bf16.gmra.mrb[0].mxu0 %v965
        %v1085 = vpop.f32.mrb[0].mxu0
        %v1086 = vadd.f32 0.0, %v1085
        %v1087 = vpop.f32.mrb[0].mxu0
        %v1088 = vpop.f32.mrb[0].mxu0
        %v1089 = vadd.f32 0.0, %v1088
        %v1090 = vpop.f32.mrb[0].mxu0
        %1091 = vmatprep.mubr.bf16.mxu0 0
        %1092 = vmatmul.mubr.bf16.gmra.mrb[0].mxu0 %v973
        %v1093 = vpop.f32.mrb[0].mxu0
        %v1094 = vadd.f32 0.0, %v1093
        %v1095 = vpop.f32.mrb[0].mxu0
        %v1096 = vpop.f32.mrb[0].mxu0
        %v1097 = vadd.f32 0.0, %v1096
        %v1098 = vpop.f32.mrb[0].mxu0
        %1099 = vmatprep.mubr.bf16.mxu0 0
        %1100 = vmatmul.mubr.bf16.gmra.mrb[0].mxu0 %v981
        %v1101 = vpop.f32.mrb[0].mxu0
        %v1102 = vadd.f32 0.0, %v1101
        %v1103 = vpop.f32.mrb[0].mxu0
        %v1104 = vpop.f32.mrb[0].mxu0
        %v1105 = vadd.f32 0.0, %v1104
        %v1106 = vpop.f32.mrb[0].mxu0
        %1107 = vmatprep.mubr.bf16.mxu0 0
        %1108 = vmatmul.mubr.bf16.gmra.mrb[0].mxu0 %v989
        %v1109 = vpop.f32.mrb[0].mxu0
        %v1110 = vadd.f32 0.0, %v1109
        %v1111 = vpop.f32.mrb[0].mxu0
        %v1112 = vpop.f32.mrb[0].mxu0
        %v1113 = vadd.f32 0.0, %v1112
        %v1114 = vpop.f32.mrb[0].mxu0
        %1115 = vmatprep.mubr.bf16.mxu0 0
        %1116 = vmatmul.mubr.bf16.gmra.mrb[0].mxu0 %v997
        %v1117 = vpop.f32.mrb[0].mxu0
        %v1118 = vadd.f32 0.0, %v1117
        %v1119 = vpop.f32.mrb[0].mxu0
        %v1120 = vpop.f32.mrb[0].mxu0
        %v1121 = vadd.f32 0.0, %v1120
        %v1122 = vpop.f32.mrb[0].mxu0
        %1123 = vdwg.mxu0
        %v1124 = vadd.f32 %v889, %v1086
        %v1125 = vadd.f32 %v890, %v1089
        %v1126 = vadd.f32 %v891, %v1094
        %v1127 = vadd.f32 %v892, %v1097
        %v1128 = vadd.f32 %v893, %v1102
        %v1129 = vadd.f32 %v894, %v1105
        %v1130 = vadd.f32 %v895, %v1110
        %v1131 = vadd.f32 %v896, %v1113
        %v1132 = vadd.f32 %v897, %v1118
        %v1133 = vadd.f32 %v898, %v1121
        %v1134 = vld [vmem:[%s239 + $0x8] sm:$0xe]
        %v1135 = vld [vmem:[#allocation5 + $0x100] sm:$0xf]
        %v1136 = vld [vmem:[#allocation5 + $0x104] sm:$0xf]
        %v1137 = vld [vmem:[#allocation5 + $0x108] sm:$0xf]
        %v1138 = vld [vmem:[#allocation5 + $0x10c] sm:$0xf]
        %v1139 = vld [vmem:[#allocation5 + $0x110] sm:$0xf]
        %v1140 = vld [vmem:[#allocation5 + $0x114] sm:$0xf]
        %v1141 = vld [vmem:[#allocation5 + $0x118] sm:$0xf]
        %v1142 = vld [vmem:[#allocation5 + $0x11c] sm:$0xf]
        %v1143 = vld [vmem:[#allocation5 + $0x120] sm:$0xf]
        %v1144 = vld [vmem:[#allocation5 + $0x124] sm:$0xf]
        %v1145 = vld [vmem:[#allocation5 + $0x128] sm:$0xf]
        %v1146 = vld [vmem:[#allocation5 + $0x12c] sm:$0xf]
        %v1147 = vld [vmem:[#allocation5 + $0x130] sm:$0xf]
        %v1148 = vld [vmem:[#allocation5 + $0x134] sm:$0xf]
        %v1149 = vld [vmem:[#allocation5 + $0x138] sm:$0xf]
        %v1150 = vld [vmem:[#allocation5 + $0x13c] sm:$0xf]
        %v1152 = vunpack.c.l.b16 %v1134
        %v1153 = vpack.c.b16 %v938, %v1152
        %vm1154 = vcmask 1046528
        %v1155 = vrot.slane %v1153, 1
        %v1156 = vrot.slane %v949, 1
        %v1157 = vsel %vm1154, %v1155, %v1156
        %v1158 = vrot.slane %v950, 1
        %v1159 = vsel %vm1154, %v1156, %v1158
        %v1160 = vrot.slane %v951, 1
        %v1161 = vsel %vm1154, %v1158, %v1160
        %v1162 = vrot.slane %v952, 1
        %v1163 = vsel %vm1154, %v1160, %v1162
        %v1164 = vrot.slane %v953, 1
        %v1165 = vsel %vm1154, %v1162, %v1164
        %v1187 = vunpack.c.l.b16 %v1135
        %v1188 = vunpack.c.l.b16 %v1136
        %v1189 = vunpack.c.l.b16 %v1137
        %v1190 = vunpack.c.l.b16 %v1138
        %v1191 = vunpack.c.l.b16 %v1139
        %v1192 = vunpack.c.l.b16 %v1140
        %v1193 = vunpack.c.l.b16 %v1141
        %v1194 = vunpack.c.l.b16 %v1142
        %v1195 = vunpack.c.l.b16 %v1143
        %v1196 = vunpack.c.l.b16 %v1144
        %v1197 = vunpack.c.l.b16 %v1145
        %v1198 = vunpack.c.l.b16 %v1146
        %v1199 = vunpack.c.l.b16 %v1147
        %v1200 = vunpack.c.l.b16 %v1148
        %v1201 = vunpack.c.l.b16 %v1149
        %v1202 = vunpack.c.l.b16 %v1150
        %v1203 = vpack.c.b16 %v1188, %v1187
        %v1204 = vpack.c.b16 %v1190, %v1189
        %v1205 = vpack.c.b16 %v1192, %v1191
        %v1206 = vpack.c.b16 %v1194, %v1193
        %v1207 = vpack.c.b16 %v1196, %v1195
        %v1208 = vpack.c.b16 %v1198, %v1197
        %v1209 = vpack.c.b16 %v1200, %v1199
        %v1210 = vpack.c.b16 %v1202, %v1201
        %1219 = vmatprep.subr.bf16.mxu0 0
        %1220 = vmatpush1.bf16.msra.mxu0 %v1203
        %1221 = vmatprep.subr.bf16.mxu0 0
        %1222 = vmatpush1.bf16.msra.mxu0 %v1204
        %1223 = vmatprep.subr.bf16.mxu0 0
        %1224 = vmatpush1.bf16.msra.mxu0 %v1205
        %1225 = vmatprep.subr.bf16.mxu0 0
        %1226 = vmatpush1.bf16.msra.mxu0 %v1206
        %1227 = vmatprep.subr.bf16.mxu0 0
        %1228 = vmatpush1.bf16.msra.mxu0 %v1207
        %1229 = vmatprep.subr.bf16.mxu0 0
        %1230 = vmatpush1.bf16.msra.mxu0 %v1208
        %1231 = vmatprep.subr.bf16.mxu0 0
        %1232 = vmatpush1.bf16.msra.mxu0 %v1209
        %1233 = vmatprep.subr.bf16.mxu0 0
        %1234 = vmatpush1.bf16.msra.mxu0 %v1210
        %1235 = vmatprep.subr.bf16.mxu0 0
        %1236 = vmatpush1.bf16.msra.mxu0 0
        %1237 = vmatprep.subr.bf16.mxu0 0
        %1238 = vmatpush1.bf16.msra.mxu0 0
        %1239 = vmatprep.subr.bf16.mxu0 0
        %1240 = vmatpush1.bf16.msra.mxu0 0
        %1241 = vmatprep.subr.bf16.mxu0 0
        %1242 = vmatpush1.bf16.msra.mxu0 0
        %1243 = vmatprep.subr.bf16.mxu0 0
        %1244 = vmatpush1.bf16.msra.mxu0 0
        %1245 = vmatprep.subr.bf16.mxu0 0
        %1246 = vmatpush1.bf16.msra.mxu0 0
        %1247 = vmatprep.subr.bf16.mxu0 0
        %1248 = vmatpush1.bf16.msra.mxu0 0
        %1249 = vmatprep.subr.bf16.mxu0 0
        %1250 = vmatpush1.bf16.msra.mxu0 0
        %1251 = vmatprep.mubr.bf16.mxu0 0
        %1252 = vmatmul.mubr.bf16.gmra.mrb[0].mxu0 %v1157
        %v1253 = vpop.f32.mrb[0].mxu0
        %v1254 = vadd.f32 0.0, %v1253
        %v1255 = vpop.f32.mrb[0].mxu0
        %v1256 = vpop.f32.mrb[0].mxu0
        %v1257 = vadd.f32 0.0, %v1256
        %v1258 = vpop.f32.mrb[0].mxu0
        %1259 = vmatprep.mubr.bf16.mxu0 0
        %1260 = vmatmul.mubr.bf16.gmra.mrb[0].mxu0 %v1159
        %v1261 = vpop.f32.mrb[0].mxu0
        %v1262 = vadd.f32 0.0, %v1261
        %v1263 = vpop.f32.mrb[0].mxu0
        %v1264 = vpop.f32.mrb[0].mxu0
        %v1265 = vadd.f32 0.0, %v1264
        %v1266 = vpop.f32.mrb[0].mxu0
        %1267 = vmatprep.mubr.bf16.mxu0 0
        %1268 = vmatmul.mubr.bf16.gmra.mrb[0].mxu0 %v1161
        %v1269 = vpop.f32.mrb[0].mxu0
        %v1270 = vadd.f32 0.0, %v1269
        %v1271 = vpop.f32.mrb[0].mxu0
        %v1272 = vpop.f32.mrb[0].mxu0
        %v1273 = vadd.f32 0.0, %v1272
        %v1274 = vpop.f32.mrb[0].mxu0
        %1275 = vmatprep.mubr.bf16.mxu0 0
        %1276 = vmatmul.mubr.bf16.gmra.mrb[0].mxu0 %v1163
        %v1277 = vpop.f32.mrb[0].mxu0
        %v1278 = vadd.f32 0.0, %v1277
        %v1279 = vpop.f32.mrb[0].mxu0
        %v1280 = vpop.f32.mrb[0].mxu0
        %v1281 = vadd.f32 0.0, %v1280
        %v1282 = vpop.f32.mrb[0].mxu0
        %1283 = vmatprep.mubr.bf16.mxu0 0
        %1284 = vmatmul.mubr.bf16.gmra.mrb[0].mxu0 %v1165
        %v1285 = vpop.f32.mrb[0].mxu0
        %v1286 = vadd.f32 0.0, %v1285
        %v1287 = vpop.f32.mrb[0].mxu0
        %v1288 = vpop.f32.mrb[0].mxu0
        %v1289 = vadd.f32 0.0, %v1288
        %v1290 = vpop.f32.mrb[0].mxu0
        %1291 = vdwg.mxu0
        %v1292 = vadd.f32 %v1124, %v1254
        %v1293 = vadd.f32 %v1125, %v1257
        %v1294 = vadd.f32 %v1126, %v1262
        %v1295 = vadd.f32 %v1127, %v1265
        %v1296 = vadd.f32 %v1128, %v1270
        %v1297 = vadd.f32 %v1129, %v1273
        %v1298 = vadd.f32 %v1130, %v1278
        %v1299 = vadd.f32 %v1131, %v1281
        %v1300 = vadd.f32 %v1132, %v1286
        %v1301 = vadd.f32 %v1133, %v1289
        %v1302 = vld [vmem:[%s239 + $0x30] sm:$0x3]
        %v1303 = vld [vmem:[#allocation5 + $0x140] sm:$0xf]
        %v1304 = vld [vmem:[#allocation5 + $0x144] sm:$0xf]
        %v1305 = vld [vmem:[#allocation5 + $0x148] sm:$0xf]
        %v1306 = vld [vmem:[#allocation5 + $0x14c] sm:$0xf]
        %v1307 = vld [vmem:[#allocation5 + $0x150] sm:$0xf]
        %v1308 = vld [vmem:[#allocation5 + $0x154] sm:$0xf]
        %v1309 = vld [vmem:[#allocation5 + $0x158] sm:$0xf]
        %v1310 = vld [vmem:[#allocation5 + $0x15c] sm:$0xf]
        %v1311 = vld [vmem:[#allocation5 + $0x160] sm:$0xf]
        %v1312 = vld [vmem:[#allocation5 + $0x164] sm:$0xf]
        %v1313 = vld [vmem:[#allocation5 + $0x168] sm:$0xf]
        %v1314 = vld [vmem:[#allocation5 + $0x16c] sm:$0xf]
        %v1315 = vld [vmem:[#allocation5 + $0x170] sm:$0xf]
        %v1316 = vld [vmem:[#allocation5 + $0x174] sm:$0xf]
        %v1317 = vld [vmem:[#allocation5 + $0x178] sm:$0xf]
        %v1318 = vld [vmem:[#allocation5 + $0x17c] sm:$0xf]
        %v1320 = vunpack.c.l.b16 %v1302
        %v1321 = vpack.c.b16 %v1320, %v1320
        %vm1322 = vsmask.f32 6400
        %v1324 = vshrl.u32 %v1153, 16
        %v1326 = vrot.slane %v1324, 1
        %v1327 = vshll.u32 %v1153, 16
        %v1329 = vrot.slane %v1327, 2
        %v1330 = vor.u32 %v1326, %v1329
        %v1331 = vrot.slane %v966, 1
        %v1332 = vrot.slane %v962, 2
        %v1333 = vor.u32 %v1331, %v1332
        %v1334 = vsel %vm1322, %v1330, %v1333
        %v1335 = vrot.slane %v974, 1
        %v1336 = vrot.slane %v970, 2
        %v1337 = vor.u32 %v1335, %v1336
        %v1338 = vsel %vm1322, %v1333, %v1337
        %v1339 = vrot.slane %v982, 1
        %v1340 = vrot.slane %v978, 2
        %v1341 = vor.u32 %v1339, %v1340
        %v1342 = vsel %vm1322, %v1337, %v1341
        %v1343 = vrot.slane %v990, 1
        %v1344 = vrot.slane %v986, 2
        %v1345 = vor.u32 %v1343, %v1344
        %v1346 = vsel %vm1322, %v1341, %v1345
        %v1348 = vshrl.u32 %v1321, 16
        %v1350 = vrot.slane %v1348, 1
        %v1351 = vshll.u32 %v1321, 16
        %v1353 = vrot.slane %v1351, 2
        %v1354 = vor.u32 %v1350, %v1353
        %v1355 = vsel %vm1322, %v1345, %v1354
        %v1377 = vunpack.c.l.b16 %v1303
        %v1378 = vunpack.c.l.b16 %v1304
        %v1379 = vunpack.c.l.b16 %v1305
        %v1380 = vunpack.c.l.b16 %v1306
        %v1381 = vunpack.c.l.b16 %v1307
        %v1382 = vunpack.c.l.b16 %v1308
        %v1383 = vunpack.c.l.b16 %v1309
        %v1384 = vunpack.c.l.b16 %v1310
        %v1385 = vunpack.c.l.b16 %v1311
        %v1386 = vunpack.c.l.b16 %v1312
        %v1387 = vunpack.c.l.b16 %v1313
        %v1388 = vunpack.c.l.b16 %v1314
        %v1389 = vunpack.c.l.b16 %v1315
        %v1390 = vunpack.c.l.b16 %v1316
        %v1391 = vunpack.c.l.b16 %v1317
        %v1392 = vunpack.c.l.b16 %v1318
        %v1393 = vpack.c.b16 %v1378, %v1377
        %v1394 = vpack.c.b16 %v1380, %v1379
        %v1395 = vpack.c.b16 %v1382, %v1381
        %v1396 = vpack.c.b16 %v1384, %v1383
        %v1397 = vpack.c.b16 %v1386, %v1385
        %v1398 = vpack.c.b16 %v1388, %v1387
        %v1399 = vpack.c.b16 %v1390, %v1389
        %v1400 = vpack.c.b16 %v1392, %v1391
        %1409 = vmatprep.subr.bf16.mxu0 0
        %1410 = vmatpush1.bf16.msra.mxu0 %v1393
        %1411 = vmatprep.subr.bf16.mxu0 0
        %1412 = vmatpush1.bf16.msra.mxu0 %v1394
        %1413 = vmatprep.subr.bf16.mxu0 0
        %1414 = vmatpush1.bf16.msra.mxu0 %v1395
        %1415 = vmatprep.subr.bf16.mxu0 0
        %1416 = vmatpush1.bf16.msra.mxu0 %v1396
        %1417 = vmatprep.subr.bf16.mxu0 0
        %1418 = vmatpush1.bf16.msra.mxu0 %v1397
        %1419 = vmatprep.subr.bf16.mxu0 0
        %1420 = vmatpush1.bf16.msra.mxu0 %v1398
        %1421 = vmatprep.subr.bf16.mxu0 0
        %1422 = vmatpush1.bf16.msra.mxu0 %v1399
        %1423 = vmatprep.subr.bf16.mxu0 0
        %1424 = vmatpush1.bf16.msra.mxu0 %v1400
        %1425 = vmatprep.subr.bf16.mxu0 0
        %1426 = vmatpush1.bf16.msra.mxu0 0
        %1427 = vmatprep.subr.bf16.mxu0 0
        %1428 = vmatpush1.bf16.msra.mxu0 0
        %1429 = vmatprep.subr.bf16.mxu0 0
        %1430 = vmatpush1.bf16.msra.mxu0 0
        %1431 = vmatprep.subr.bf16.mxu0 0
        %1432 = vmatpush1.bf16.msra.mxu0 0
        %1433 = vmatprep.subr.bf16.mxu0 0
        %1434 = vmatpush1.bf16.msra.mxu0 0
        %1435 = vmatprep.subr.bf16.mxu0 0
        %1436 = vmatpush1.bf16.msra.mxu0 0
        %1437 = vmatprep.subr.bf16.mxu0 0
        %1438 = vmatpush1.bf16.msra.mxu0 0
        %1439 = vmatprep.subr.bf16.mxu0 0
        %1440 = vmatpush1.bf16.msra.mxu0 0
        %1441 = vmatprep.mubr.bf16.mxu0 0
        %1442 = vmatmul.mubr.bf16.gmra.mrb[0].mxu0 %v1334
        %v1443 = vpop.f32.mrb[0].mxu0
        %v1444 = vadd.f32 0.0, %v1443
        %v1445 = vpop.f32.mrb[0].mxu0
        %v1446 = vpop.f32.mrb[0].mxu0
        %v1447 = vadd.f32 0.0, %v1446
        %v1448 = vpop.f32.mrb[0].mxu0
        %1449 = vmatprep.mubr.bf16.mxu0 0
        %1450 = vmatmul.mubr.bf16.gmra.mrb[0].mxu0 %v1338
        %v1451 = vpop.f32.mrb[0].mxu0
        %v1452 = vadd.f32 0.0, %v1451
        %v1453 = vpop.f32.mrb[0].mxu0
        %v1454 = vpop.f32.mrb[0].mxu0
        %v1455 = vadd.f32 0.0, %v1454
        %v1456 = vpop.f32.mrb[0].mxu0
        %1457 = vmatprep.mubr.bf16.mxu0 0
        %1458 = vmatmul.mubr.bf16.gmra.mrb[0].mxu0 %v1342
        %v1459 = vpop.f32.mrb[0].mxu0
        %v1460 = vadd.f32 0.0, %v1459
        %v1461 = vpop.f32.mrb[0].mxu0
        %v1462 = vpop.f32.mrb[0].mxu0
        %v1463 = vadd.f32 0.0, %v1462
        %v1464 = vpop.f32.mrb[0].mxu0
        %1465 = vmatprep.mubr.bf16.mxu0 0
        %1466 = vmatmul.mubr.bf16.gmra.mrb[0].mxu0 %v1346
        %v1467 = vpop.f32.mrb[0].mxu0
        %v1468 = vadd.f32 0.0, %v1467
        %v1469 = vpop.f32.mrb[0].mxu0
        %v1470 = vpop.f32.mrb[0].mxu0
        %v1471 = vadd.f32 0.0, %v1470
        %v1472 = vpop.f32.mrb[0].mxu0
        %1473 = vmatprep.mubr.bf16.mxu0 0
        %1474 = vmatmul.mubr.bf16.gmra.mrb[0].mxu0 %v1355
        %v1475 = vpop.f32.mrb[0].mxu0
        %v1476 = vadd.f32 0.0, %v1475
        %v1477 = vpop.f32.mrb[0].mxu0
        %v1478 = vpop.f32.mrb[0].mxu0
        %v1479 = vadd.f32 0.0, %v1478
        %v1480 = vpop.f32.mrb[0].mxu0
        %1481 = vdwg.mxu0
        %v1482 = vadd.f32 %v1292, %v1444
        %v1483 = vadd.f32 %v1293, %v1447
        %v1484 = vadd.f32 %v1294, %v1452
        %v1485 = vadd.f32 %v1295, %v1455
        %v1486 = vadd.f32 %v1296, %v1460
        %v1487 = vadd.f32 %v1297, %v1463
        %v1488 = vadd.f32 %v1298, %v1468
        %v1489 = vadd.f32 %v1299, %v1471
        %v1490 = vadd.f32 %v1300, %v1476
        %v1491 = vadd.f32 %v1301, %v1479
        %v1492 = vld [vmem:[%s239 + $0xc] sm:$0xe]
        %v1493 = vld [vmem:[%s239 + $0x10] sm:$0xf]
        %v1494 = vld [vmem:[%s239 + $0x14] sm:$0xf]
        %v1495 = vld [vmem:[%s239 + $0x18] sm:$0xf]
        %v1496 = vld [vmem:[%s239 + $0x1c] sm:$0xf]
        %v1497 = vld [vmem:[%s239 + $0x20] sm:$0xf]
        %v1498 = vld [vmem:[%s239 + $0x24] sm:$0xf]
        %v1499 = vld [vmem:[%s239 + $0x28] sm:$0xf]
        %v1500 = vld [vmem:[%s239 + $0x2c] sm:$0xf]
        %v1501 = vld [vmem:[%s239 + $0x30] sm:$0xf]
        %v1502 = vld [vmem:[%s239 + $0x34] sm:$0x3]
        %v1503 = vld [vmem:[#allocation5 + $0x180] sm:$0xf]
        %v1504 = vld [vmem:[#allocation5 + $0x184] sm:$0xf]
        %v1505 = vld [vmem:[#allocation5 + $0x188] sm:$0xf]
        %v1506 = vld [vmem:[#allocation5 + $0x18c] sm:$0xf]
        %v1507 = vld [vmem:[#allocation5 + $0x190] sm:$0xf]
        %v1508 = vld [vmem:[#allocation5 + $0x194] sm:$0xf]
        %v1509 = vld [vmem:[#allocation5 + $0x198] sm:$0xf]
        %v1510 = vld [vmem:[#allocation5 + $0x19c] sm:$0xf]
        %v1511 = vld [vmem:[#allocation5 + $0x1a0] sm:$0xf]
        %v1512 = vld [vmem:[#allocation5 + $0x1a4] sm:$0xf]
        %v1513 = vld [vmem:[#allocation5 + $0x1a8] sm:$0xf]
        %v1514 = vld [vmem:[#allocation5 + $0x1ac] sm:$0xf]
        %v1515 = vld [vmem:[#allocation5 + $0x1b0] sm:$0xf]
        %v1516 = vld [vmem:[#allocation5 + $0x1b4] sm:$0xf]
        %v1517 = vld [vmem:[#allocation5 + $0x1b8] sm:$0xf]
        %v1518 = vld [vmem:[#allocation5 + $0x1bc] sm:$0xf]
        %v1530 = vunpack.c.l.b16 %v1492
        %v1531 = vunpack.c.l.b16 %v1493
        %v1532 = vunpack.c.l.b16 %v1494
        %v1533 = vunpack.c.l.b16 %v1495
        %v1534 = vunpack.c.l.b16 %v1496
        %v1535 = vunpack.c.l.b16 %v1497
        %v1536 = vunpack.c.l.b16 %v1498
        %v1537 = vunpack.c.l.b16 %v1499
        %v1538 = vunpack.c.l.b16 %v1500
        %v1539 = vunpack.c.l.b16 %v1501
        %v1540 = vunpack.c.l.b16 %v1502
        %v1541 = vpack.c.b16 %v1531, %v1530
        %v1542 = vpack.c.b16 %v1533, %v1532
        %v1543 = vpack.c.b16 %v1535, %v1534
        %v1544 = vpack.c.b16 %v1537, %v1536
        %v1545 = vpack.c.b16 %v1539, %v1538
        %v1546 = vpack.c.b16 %v1540, %v1540
        %v1548 = vshrl.u32 %v1541, 16
        %v1550 = vrot.slane %v1548, 1
        %v1551 = vshll.u32 %v1541, 16
        %v1553 = vrot.slane %v1551, 2
        %v1554 = vor.u32 %v1550, %v1553
        %v1556 = vshrl.u32 %v1542, 16
        %v1558 = vrot.slane %v1556, 1
        %v1559 = vshll.u32 %v1542, 16
        %v1561 = vrot.slane %v1559, 2
        %v1562 = vor.u32 %v1558, %v1561
        %v1563 = vsel %vm1322, %v1554, %v1562
        %v1565 = vshrl.u32 %v1543, 16
        %v1567 = vrot.slane %v1565, 1
        %v1568 = vshll.u32 %v1543, 16
        %v1570 = vrot.slane %v1568, 2
        %v1571 = vor.u32 %v1567, %v1570
        %v1572 = vsel %vm1322, %v1562, %v1571
        %v1574 = vshrl.u32 %v1544, 16
        %v1576 = vrot.slane %v1574, 1
        %v1577 = vshll.u32 %v1544, 16
        %v1579 = vrot.slane %v1577, 2
        %v1580 = vor.u32 %v1576, %v1579
        %v1581 = vsel %vm1322, %v1571, %v1580
        %v1583 = vshrl.u32 %v1545, 16
        %v1585 = vrot.slane %v1583, 1
        %v1586 = vshll.u32 %v1545, 16
        %v1588 = vrot.slane %v1586, 2
        %v1589 = vor.u32 %v1585, %v1588
        %v1590 = vsel %vm1322, %v1580, %v1589
        %v1592 = vshrl.u32 %v1546, 16
        %v1594 = vrot.slane %v1592, 1
        %v1595 = vshll.u32 %v1546, 16
        %v1597 = vrot.slane %v1595, 2
        %v1598 = vor.u32 %v1594, %v1597
        %v1599 = vsel %vm1322, %v1589, %v1598
        %v1621 = vunpack.c.l.b16 %v1503
        %v1622 = vunpack.c.l.b16 %v1504
        %v1623 = vunpack.c.l.b16 %v1505
        %v1624 = vunpack.c.l.b16 %v1506
        %v1625 = vunpack.c.l.b16 %v1507
        %v1626 = vunpack.c.l.b16 %v1508
        %v1627 = vunpack.c.l.b16 %v1509
        %v1628 = vunpack.c.l.b16 %v1510
        %v1629 = vunpack.c.l.b16 %v1511
        %v1630 = vunpack.c.l.b16 %v1512
        %v1631 = vunpack.c.l.b16 %v1513
        %v1632 = vunpack.c.l.b16 %v1514
        %v1633 = vunpack.c.l.b16 %v1515
        %v1634 = vunpack.c.l.b16 %v1516
        %v1635 = vunpack.c.l.b16 %v1517
        %v1636 = vunpack.c.l.b16 %v1518
        %v1637 = vpack.c.b16 %v1622, %v1621
        %v1638 = vpack.c.b16 %v1624, %v1623
        %v1639 = vpack.c.b16 %v1626, %v1625
        %v1640 = vpack.c.b16 %v1628, %v1627
        %v1641 = vpack.c.b16 %v1630, %v1629
        %v1642 = vpack.c.b16 %v1632, %v1631
        %v1643 = vpack.c.b16 %v1634, %v1633
        %v1644 = vpack.c.b16 %v1636, %v1635
        %1653 = vmatprep.subr.bf16.mxu0 0
        %1654 = vmatpush1.bf16.msra.mxu0 %v1637
        %1655 = vmatprep.subr.bf16.mxu0 0
        %1656 = vmatpush1.bf16.msra.mxu0 %v1638
        %1657 = vmatprep.subr.bf16.mxu0 0
        %1658 = vmatpush1.bf16.msra.mxu0 %v1639
        %1659 = vmatprep.subr.bf16.mxu0 0
        %1660 = vmatpush1.bf16.msra.mxu0 %v1640
        %1661 = vmatprep.subr.bf16.mxu0 0
        %1662 = vmatpush1.bf16.msra.mxu0 %v1641
        %1663 = vmatprep.subr.bf16.mxu0 0
        %1664 = vmatpush1.bf16.msra.mxu0 %v1642
        %1665 = vmatprep.subr.bf16.mxu0 0
        %1666 = vmatpush1.bf16.msra.mxu0 %v1643
        %1667 = vmatprep.subr.bf16.mxu0 0
        %1668 = vmatpush1.bf16.msra.mxu0 %v1644
        %1669 = vmatprep.subr.bf16.mxu0 0
        %1670 = vmatpush1.bf16.msra.mxu0 0
        %1671 = vmatprep.subr.bf16.mxu0 0
        %1672 = vmatpush1.bf16.msra.mxu0 0
        %1673 = vmatprep.subr.bf16.mxu0 0
        %1674 = vmatpush1.bf16.msra.mxu0 0
        %1675 = vmatprep.subr.bf16.mxu0 0
        %1676 = vmatpush1.bf16.msra.mxu0 0
        %1677 = vmatprep.subr.bf16.mxu0 0
        %1678 = vmatpush1.bf16.msra.mxu0 0
        %1679 = vmatprep.subr.bf16.mxu0 0
        %1680 = vmatpush1.bf16.msra.mxu0 0
        %1681 = vmatprep.subr.bf16.mxu0 0
        %1682 = vmatpush1.bf16.msra.mxu0 0
        %1683 = vmatprep.subr.bf16.mxu0 0
        %1684 = vmatpush1.bf16.msra.mxu0 0
        %1685 = vmatprep.mubr.bf16.mxu0 0
        %1686 = vmatmul.mubr.bf16.gmra.mrb[0].mxu0 %v1563
        %v1687 = vpop.f32.mrb[0].mxu0
        %v1688 = vadd.f32 0.0, %v1687
        %v1689 = vpop.f32.mrb[0].mxu0
        %v1690 = vpop.f32.mrb[0].mxu0
        %v1691 = vadd.f32 0.0, %v1690
        %v1692 = vpop.f32.mrb[0].mxu0
        %1693 = vmatprep.mubr.bf16.mxu0 0
        %1694 = vmatmul.mubr.bf16.gmra.mrb[0].mxu0 %v1572
        %v1695 = vpop.f32.mrb[0].mxu0
        %v1696 = vadd.f32 0.0, %v1695
        %v1697 = vpop.f32.mrb[0].mxu0
        %v1698 = vpop.f32.mrb[0].mxu0
        %v1699 = vadd.f32 0.0, %v1698
        %v1700 = vpop.f32.mrb[0].mxu0
        %1701 = vmatprep.mubr.bf16.mxu0 0
        %1702 = vmatmul.mubr.bf16.gmra.mrb[0].mxu0 %v1581
        %v1703 = vpop.f32.mrb[0].mxu0
        %v1704 = vadd.f32 0.0, %v1703
        %v1705 = vpop.f32.mrb[0].mxu0
        %v1706 = vpop.f32.mrb[0].mxu0
        %v1707 = vadd.f32 0.0, %v1706
        %v1708 = vpop.f32.mrb[0].mxu0
        %1709 = vmatprep.mubr.bf16.mxu0 0
        %1710 = vmatmul.mubr.bf16.gmra.mrb[0].mxu0 %v1590
        %v1711 = vpop.f32.mrb[0].mxu0
        %v1712 = vadd.f32 0.0, %v1711
        %v1713 = vpop.f32.mrb[0].mxu0
        %v1714 = vpop.f32.mrb[0].mxu0
        %v1715 = vadd.f32 0.0, %v1714
        %v1716 = vpop.f32.mrb[0].mxu0
        %1717 = vmatprep.mubr.bf16.mxu0 0
        %1718 = vmatmul.mubr.bf16.gmra.mrb[0].mxu0 %v1599
        %v1719 = vpop.f32.mrb[0].mxu0
        %v1720 = vadd.f32 0.0, %v1719
        %v1721 = vpop.f32.mrb[0].mxu0
        %v1722 = vpop.f32.mrb[0].mxu0
        %v1723 = vadd.f32 0.0, %v1722
        %v1724 = vpop.f32.mrb[0].mxu0
        %1725 = vdwg.mxu0
        %v1726 = vadd.f32 %v1482, %v1688
        %v1727 = vadd.f32 %v1483, %v1691
        %v1728 = vadd.f32 %v1484, %v1696
        %v1729 = vadd.f32 %v1485, %v1699
        %v1730 = vadd.f32 %v1486, %v1704
        %v1731 = vadd.f32 %v1487, %v1707
        %v1732 = vadd.f32 %v1488, %v1712
        %v1733 = vadd.f32 %v1489, %v1715
        %v1734 = vadd.f32 %v1490, %v1720
        %v1735 = vadd.f32 %v1491, %v1723
        %v1736 = vld [vmem:[%s239 + $0xc] sm:$0xc]
        %v1737 = vld [vmem:[#allocation5 + $0x1c0] sm:$0xf]
        %v1738 = vld [vmem:[#allocation5 + $0x1c4] sm:$0xf]
        %v1739 = vld [vmem:[#allocation5 + $0x1c8] sm:$0xf]
        %v1740 = vld [vmem:[#allocation5 + $0x1cc] sm:$0xf]
        %v1741 = vld [vmem:[#allocation5 + $0x1d0] sm:$0xf]
        %v1742 = vld [vmem:[#allocation5 + $0x1d4] sm:$0xf]
        %v1743 = vld [vmem:[#allocation5 + $0x1d8] sm:$0xf]
        %v1744 = vld [vmem:[#allocation5 + $0x1dc] sm:$0xf]
        %v1745 = vld [vmem:[#allocation5 + $0x1e0] sm:$0xf]
        %v1746 = vld [vmem:[#allocation5 + $0x1e4] sm:$0xf]
        %v1747 = vld [vmem:[#allocation5 + $0x1e8] sm:$0xf]
        %v1748 = vld [vmem:[#allocation5 + $0x1ec] sm:$0xf]
        %v1749 = vld [vmem:[#allocation5 + $0x1f0] sm:$0xf]
        %v1750 = vld [vmem:[#allocation5 + $0x1f4] sm:$0xf]
        %v1751 = vld [vmem:[#allocation5 + $0x1f8] sm:$0xf]
        %v1752 = vld [vmem:[#allocation5 + $0x1fc] sm:$0xf]
        %v1754 = vunpack.c.l.b16 %v1736
        %v1755 = vpack.c.b16 %v1531, %v1754
        %vm1756 = vcmask 1045504
        %v1757 = vrot.slane %v1755, 2
        %v1758 = vrot.slane %v1542, 2
        %v1759 = vsel %vm1756, %v1757, %v1758
        %v1760 = vrot.slane %v1543, 2
        %v1761 = vsel %vm1756, %v1758, %v1760
        %v1762 = vrot.slane %v1544, 2
        %v1763 = vsel %vm1756, %v1760, %v1762
        %v1764 = vrot.slane %v1545, 2
        %v1765 = vsel %vm1756, %v1762, %v1764
        %v1766 = vrot.slane %v1546, 2
        %v1767 = vsel %vm1756, %v1764, %v1766
        %v1789 = vunpack.c.l.b16 %v1737
        %v1790 = vunpack.c.l.b16 %v1738
        %v1791 = vunpack.c.l.b16 %v1739
        %v1792 = vunpack.c.l.b16 %v1740
        %v1793 = vunpack.c.l.b16 %v1741
        %v1794 = vunpack.c.l.b16 %v1742
        %v1795 = vunpack.c.l.b16 %v1743
        %v1796 = vunpack.c.l.b16 %v1744
        %v1797 = vunpack.c.l.b16 %v1745
        %v1798 = vunpack.c.l.b16 %v1746
        %v1799 = vunpack.c.l.b16 %v1747
        %v1800 = vunpack.c.l.b16 %v1748
        %v1801 = vunpack.c.l.b16 %v1749
        %v1802 = vunpack.c.l.b16 %v1750
        %v1803 = vunpack.c.l.b16 %v1751
        %v1804 = vunpack.c.l.b16 %v1752
        %v1805 = vpack.c.b16 %v1790, %v1789
        %v1806 = vpack.c.b16 %v1792, %v1791
        %v1807 = vpack.c.b16 %v1794, %v1793
        %v1808 = vpack.c.b16 %v1796, %v1795
        %v1809 = vpack.c.b16 %v1798, %v1797
        %v1810 = vpack.c.b16 %v1800, %v1799
        %v1811 = vpack.c.b16 %v1802, %v1801
        %v1812 = vpack.c.b16 %v1804, %v1803
        %1821 = vmatprep.subr.bf16.mxu0 0
        %1822 = vmatpush1.bf16.msra.mxu0 %v1805
        %1823 = vmatprep.subr.bf16.mxu0 0
        %1824 = vmatpush1.bf16.msra.mxu0 %v1806
        %1825 = vmatprep.subr.bf16.mxu0 0
        %1826 = vmatpush1.bf16.msra.mxu0 %v1807
        %1827 = vmatprep.subr.bf16.mxu0 0
        %1828 = vmatpush1.bf16.msra.mxu0 %v1808
        %1829 = vmatprep.subr.bf16.mxu0 0
        %1830 = vmatpush1.bf16.msra.mxu0 %v1809
        %1831 = vmatprep.subr.bf16.mxu0 0
        %1832 = vmatpush1.bf16.msra.mxu0 %v1810
        %1833 = vmatprep.subr.bf16.mxu0 0
        %1834 = vmatpush1.bf16.msra.mxu0 %v1811
        %1835 = vmatprep.subr.bf16.mxu0 0
        %1836 = vmatpush1.bf16.msra.mxu0 %v1812
        %1837 = vmatprep.subr.bf16.mxu0 0
        %1838 = vmatpush1.bf16.msra.mxu0 0
        %1839 = vmatprep.subr.bf16.mxu0 0
        %1840 = vmatpush1.bf16.msra.mxu0 0
        %1841 = vmatprep.subr.bf16.mxu0 0
        %1842 = vmatpush1.bf16.msra.mxu0 0
        %1843 = vmatprep.subr.bf16.mxu0 0
        %1844 = vmatpush1.bf16.msra.mxu0 0
        %1845 = vmatprep.subr.bf16.mxu0 0
        %1846 = vmatpush1.bf16.msra.mxu0 0
        %1847 = vmatprep.subr.bf16.mxu0 0
        %1848 = vmatpush1.bf16.msra.mxu0 0
        %1849 = vmatprep.subr.bf16.mxu0 0
        %1850 = vmatpush1.bf16.msra.mxu0 0
        %1851 = vmatprep.subr.bf16.mxu0 0
        %1852 = vmatpush1.bf16.msra.mxu0 0
        %1853 = vmatprep.mubr.bf16.mxu0 0
        %1854 = vmatmul.mubr.bf16.gmra.mrb[0].mxu0 %v1759
        %v1855 = vpop.f32.mrb[0].mxu0
        %v1856 = vadd.f32 0.0, %v1855
        %v1857 = vpop.f32.mrb[0].mxu0
        %v1858 = vpop.f32.mrb[0].mxu0
        %v1859 = vadd.f32 0.0, %v1858
        %v1860 = vpop.f32.mrb[0].mxu0
        %1861 = vmatprep.mubr.bf16.mxu0 0
        %1862 = vmatmul.mubr.bf16.gmra.mrb[0].mxu0 %v1761
        %v1863 = vpop.f32.mrb[0].mxu0
        %v1864 = vadd.f32 0.0, %v1863
        %v1865 = vpop.f32.mrb[0].mxu0
        %v1866 = vpop.f32.mrb[0].mxu0
        %v1867 = vadd.f32 0.0, %v1866
        %v1868 = vpop.f32.mrb[0].mxu0
        %1869 = vmatprep.mubr.bf16.mxu0 0
        %1870 = vmatmul.mubr.bf16.gmra.mrb[0].mxu0 %v1763
        %v1871 = vpop.f32.mrb[0].mxu0
        %v1872 = vadd.f32 0.0, %v1871
        %v1873 = vpop.f32.mrb[0].mxu0
        %v1874 = vpop.f32.mrb[0].mxu0
        %v1875 = vadd.f32 0.0, %v1874
        %v1876 = vpop.f32.mrb[0].mxu0
        %1877 = vmatprep.mubr.bf16.mxu0 0
        %1878 = vmatmul.mubr.bf16.gmra.mrb[0].mxu0 %v1765
        %v1879 = vpop.f32.mrb[0].mxu0
        %v1880 = vadd.f32 0.0, %v1879
        %v1881 = vpop.f32.mrb[0].mxu0
        %v1882 = vpop.f32.mrb[0].mxu0
        %v1883 = vadd.f32 0.0, %v1882
        %v1884 = vpop.f32.mrb[0].mxu0
        %1885 = vmatprep.mubr.bf16.mxu0 0
        %1886 = vmatmul.mubr.bf16.gmra.mrb[0].mxu0 %v1767
        %v1887 = vpop.f32.mrb[0].mxu0
        %v1888 = vadd.f32 0.0, %v1887
        %v1889 = vpop.f32.mrb[0].mxu0
        %v1890 = vpop.f32.mrb[0].mxu0
        %v1891 = vadd.f32 0.0, %v1890
        %v1892 = vpop.f32.mrb[0].mxu0
        %1893 = vdwg.mxu0
        %v1894 = vadd.f32 %v1726, %v1856
        %v1895 = vadd.f32 %v1727, %v1859
        %v1896 = vadd.f32 %v1728, %v1864
        %v1897 = vadd.f32 %v1729, %v1867
        %v1898 = vadd.f32 %v1730, %v1872
        %v1899 = vadd.f32 %v1731, %v1875
        %v1900 = vadd.f32 %v1732, %v1880
        %v1901 = vadd.f32 %v1733, %v1883
        %v1902 = vadd.f32 %v1734, %v1888
        %v1903 = vadd.f32 %v1735, %v1891
        %v1904 = vld [vmem:[%s239 + $0x34] sm:$0x7]
        %v1905 = vld [vmem:[#allocation5 + $0x200] sm:$0xf]
        %v1906 = vld [vmem:[#allocation5 + $0x204] sm:$0xf]
        %v1907 = vld [vmem:[#allocation5 + $0x208] sm:$0xf]
        %v1908 = vld [vmem:[#allocation5 + $0x20c] sm:$0xf]
        %v1909 = vld [vmem:[#allocation5 + $0x210] sm:$0xf]
        %v1910 = vld [vmem:[#allocation5 + $0x214] sm:$0xf]
        %v1911 = vld [vmem:[#allocation5 + $0x218] sm:$0xf]
        %v1912 = vld [vmem:[#allocation5 + $0x21c] sm:$0xf]
        %v1913 = vld [vmem:[#allocation5 + $0x220] sm:$0xf]
        %v1914 = vld [vmem:[#allocation5 + $0x224] sm:$0xf]
        %v1915 = vld [vmem:[#allocation5 + $0x228] sm:$0xf]
        %v1916 = vld [vmem:[#allocation5 + $0x22c] sm:$0xf]
        %v1917 = vld [vmem:[#allocation5 + $0x230] sm:$0xf]
        %v1918 = vld [vmem:[#allocation5 + $0x234] sm:$0xf]
        %v1919 = vld [vmem:[#allocation5 + $0x238] sm:$0xf]
        %v1920 = vld [vmem:[#allocation5 + $0x23c] sm:$0xf]
        %v1922 = vunpack.c.l.b16 %v1904
        %v1923 = vpack.c.b16 %v1922, %v1922
        %vm1924 = vsmask.f32 5376
        %v1926 = vshrl.u32 %v1755, 16
        %v1928 = vrot.slane %v1926, 2
        %v1929 = vshll.u32 %v1755, 16
        %v1931 = vrot.slane %v1929, 3
        %v1932 = vor.u32 %v1928, %v1931
        %v1933 = vrot.slane %v1556, 2
        %v1934 = vrot.slane %v1559, 3
        %v1935 = vor.u32 %v1933, %v1934
        %v1936 = vsel %vm1924, %v1932, %v1935
        %v1937 = vrot.slane %v1565, 2
        %v1938 = vrot.slane %v1568, 3
        %v1939 = vor.u32 %v1937, %v1938
        %v1940 = vsel %vm1924, %v1935, %v1939
        %v1941 = vrot.slane %v1574, 2
        %v1942 = vrot.slane %v1577, 3
        %v1943 = vor.u32 %v1941, %v1942
        %v1944 = vsel %vm1924, %v1939, %v1943
        %v1945 = vrot.slane %v1583, 2
        %v1946 = vrot.slane %v1586, 3
        %v1947 = vor.u32 %v1945, %v1946
        %v1948 = vsel %vm1924, %v1943, %v1947
        %v1950 = vshrl.u32 %v1923, 16
        %v1952 = vrot.slane %v1950, 2
        %v1953 = vshll.u32 %v1923, 16
        %v1955 = vrot.slane %v1953, 3
        %v1956 = vor.u32 %v1952, %v1955
        %v1957 = vsel %vm1924, %v1947, %v1956
        %v1979 = vunpack.c.l.b16 %v1905
        %v1980 = vunpack.c.l.b16 %v1906
        %v1981 = vunpack.c.l.b16 %v1907
        %v1982 = vunpack.c.l.b16 %v1908
        %v1983 = vunpack.c.l.b16 %v1909
        %v1984 = vunpack.c.l.b16 %v1910
        %v1985 = vunpack.c.l.b16 %v1911
        %v1986 = vunpack.c.l.b16 %v1912
        %v1987 = vunpack.c.l.b16 %v1913
        %v1988 = vunpack.c.l.b16 %v1914
        %v1989 = vunpack.c.l.b16 %v1915
        %v1990 = vunpack.c.l.b16 %v1916
        %v1991 = vunpack.c.l.b16 %v1917
        %v1992 = vunpack.c.l.b16 %v1918
        %v1993 = vunpack.c.l.b16 %v1919
        %v1994 = vunpack.c.l.b16 %v1920
        %v1995 = vpack.c.b16 %v1980, %v1979
        %v1996 = vpack.c.b16 %v1982, %v1981
        %v1997 = vpack.c.b16 %v1984, %v1983
        %v1998 = vpack.c.b16 %v1986, %v1985
        %v1999 = vpack.c.b16 %v1988, %v1987
        %v2000 = vpack.c.b16 %v1990, %v1989
        %v2001 = vpack.c.b16 %v1992, %v1991
        %v2002 = vpack.c.b16 %v1994, %v1993
        %2011 = vmatprep.subr.bf16.mxu0 0
        %2012 = vmatpush1.bf16.msra.mxu0 %v1995
        %2013 = vmatprep.subr.bf16.mxu0 0
        %2014 = vmatpush1.bf16.msra.mxu0 %v1996
        %2015 = vmatprep.subr.bf16.mxu0 0
        %2016 = vmatpush1.bf16.msra.mxu0 %v1997
        %2017 = vmatprep.subr.bf16.mxu0 0
        %2018 = vmatpush1.bf16.msra.mxu0 %v1998
        %2019 = vmatprep.subr.bf16.mxu0 0
        %2020 = vmatpush1.bf16.msra.mxu0 %v1999
        %2021 = vmatprep.subr.bf16.mxu0 0
        %2022 = vmatpush1.bf16.msra.mxu0 %v2000
        %2023 = vmatprep.subr.bf16.mxu0 0
        %2024 = vmatpush1.bf16.msra.mxu0 %v2001
        %2025 = vmatprep.subr.bf16.mxu0 0
        %2026 = vmatpush1.bf16.msra.mxu0 %v2002
        %2027 = vmatprep.subr.bf16.mxu0 0
        %2028 = vmatpush1.bf16.msra.mxu0 0
        %2029 = vmatprep.subr.bf16.mxu0 0
        %2030 = vmatpush1.bf16.msra.mxu0 0
        %2031 = vmatprep.subr.bf16.mxu0 0
        %2032 = vmatpush1.bf16.msra.mxu0 0
        %2033 = vmatprep.subr.bf16.mxu0 0
        %2034 = vmatpush1.bf16.msra.mxu0 0
        %2035 = vmatprep.subr.bf16.mxu0 0
        %2036 = vmatpush1.bf16.msra.mxu0 0
        %2037 = vmatprep.subr.bf16.mxu0 0
        %2038 = vmatpush1.bf16.msra.mxu0 0
        %2039 = vmatprep.subr.bf16.mxu0 0
        %2040 = vmatpush1.bf16.msra.mxu0 0
        %2041 = vmatprep.subr.bf16.mxu0 0
        %2042 = vmatpush1.bf16.msra.mxu0 0
        %2043 = vmatprep.mubr.bf16.mxu0 0
        %2044 = vmatmul.mubr.bf16.gmra.mrb[0].mxu0 %v1936
        %v2045 = vpop.f32.mrb[0].mxu0
        %v2046 = vadd.f32 0.0, %v2045
        %v2047 = vpop.f32.mrb[0].mxu0
        %v2048 = vpop.f32.mrb[0].mxu0
        %v2049 = vadd.f32 0.0, %v2048
        %v2050 = vpop.f32.mrb[0].mxu0
        %2051 = vmatprep.mubr.bf16.mxu0 0
        %2052 = vmatmul.mubr.bf16.gmra.mrb[0].mxu0 %v1940
        %v2053 = vpop.f32.mrb[0].mxu0
        %v2054 = vadd.f32 0.0, %v2053
        %v2055 = vpop.f32.mrb[0].mxu0
        %v2056 = vpop.f32.mrb[0].mxu0
        %v2057 = vadd.f32 0.0, %v2056
        %v2058 = vpop.f32.mrb[0].mxu0
        %2059 = vmatprep.mubr.bf16.mxu0 0
        %2060 = vmatmul.mubr.bf16.gmra.mrb[0].mxu0 %v1944
        %v2061 = vpop.f32.mrb[0].mxu0
        %v2062 = vadd.f32 0.0, %v2061
        %v2063 = vpop.f32.mrb[0].mxu0
        %v2064 = vpop.f32.mrb[0].mxu0
        %v2065 = vadd.f32 0.0, %v2064
        %v2066 = vpop.f32.mrb[0].mxu0
        %2067 = vmatprep.mubr.bf16.mxu0 0
        %2068 = vmatmul.mubr.bf16.gmra.mrb[0].mxu0 %v1948
        %v2069 = vpop.f32.mrb[0].mxu0
        %v2070 = vadd.f32 0.0, %v2069
        %v2071 = vpop.f32.mrb[0].mxu0
        %v2072 = vpop.f32.mrb[0].mxu0
        %v2073 = vadd.f32 0.0, %v2072
        %v2074 = vpop.f32.mrb[0].mxu0
        %2075 = vmatprep.mubr.bf16.mxu0 0
        %2076 = vmatmul.mubr.bf16.gmra.mrb[0].mxu0 %v1957
        %v2077 = vpop.f32.mrb[0].mxu0
        %v2078 = vadd.f32 0.0, %v2077
        %v2079 = vpop.f32.mrb[0].mxu0
        %v2080 = vpop.f32.mrb[0].mxu0
        %v2081 = vadd.f32 0.0, %v2080
        %v2082 = vpop.f32.mrb[0].mxu0
        %2083 = vdwg.mxu0
        %v2084 = vadd.f32 %v1894, %v2046
        %v2085 = vadd.f32 %v1895, %v2049
        %v2086 = vadd.f32 %v1896, %v2054
        %v2087 = vadd.f32 %v1897, %v2057
        %v2088 = vadd.f32 %v1898, %v2062
        %v2089 = vadd.f32 %v1899, %v2065
        %v2090 = vadd.f32 %v1900, %v2070
        %v2091 = vadd.f32 %v1901, %v2073
        %v2092 = vadd.f32 %v1902, %v2078
        %v2093 = vadd.f32 %v1903, %v2081
        %v2094 = vld [vmem:[%s276] sm:$0x1]
        %v2096 = vlaneseq
        %v2097 = vshrl.u32 %v2096, 7
        %v2098 = vsub.s32 0, %v2097
        %v2099 = vrot.slane %v2094, %v2098
        %v2101 = vmul.f32 %v2084, %v2099
        %v2102 = vmul.f32 %v2085, %v2099
        %v2103 = vmul.f32 %v2086, %v2099
        %v2104 = vmul.f32 %v2087, %v2099
        %v2105 = vmul.f32 %v2088, %v2099
        %v2106 = vmul.f32 %v2089, %v2099
        %v2107 = vmul.f32 %v2090, %v2099
        %v2108 = vmul.f32 %v2091, %v2099
        %v2109 = vmul.f32 %v2092, %v2099
        %v2110 = vmul.f32 %v2093, %v2099
        %v2111 = vld [vmem:[%s279] sm:$0x1]
        %v2113 = vlaneseq
        %v2114 = vshrl.u32 %v2113, 7
        %v2115 = vsub.s32 0, %v2114
        %v2116 = vrot.slane %v2111, %v2115
        %v2118 = vadd.f32 %v2101, %v2116
        %v2119 = vadd.f32 %v2102, %v2116
        %v2120 = vadd.f32 %v2103, %v2116
        %v2121 = vadd.f32 %v2104, %v2116
        %v2122 = vadd.f32 %v2105, %v2116
        %v2123 = vadd.f32 %v2106, %v2116
        %v2124 = vadd.f32 %v2107, %v2116
        %v2125 = vadd.f32 %v2108, %v2116
        %v2126 = vadd.f32 %v2109, %v2116
        %v2127 = vadd.f32 %v2110, %v2116
        %v2128 = vpack.c.bf16 %v2119, %v2118
        %v2129 = vpack.c.bf16 %v2121, %v2120
        %v2130 = vpack.c.bf16 %v2123, %v2122
        %v2131 = vpack.c.bf16 %v2125, %v2124
        %v2132 = vpack.c.bf16 %v2127, %v2126
        %v2138 = vunpack.c.l.b16 %v2128
        %v2139 = vunpack.c.h.b16 %v2128
        %v2140 = vunpack.c.l.b16 %v2129
        %v2141 = vunpack.c.h.b16 %v2129
        %v2142 = vunpack.c.l.b16 %v2130
        %v2143 = vunpack.c.h.b16 %v2130
        %v2144 = vunpack.c.l.b16 %v2131
        %v2145 = vunpack.c.h.b16 %v2131
        %v2146 = vunpack.c.l.b16 %v2132
        %v2147 = vunpack.c.h.b16 %v2132
        %v2148 = vpack.c.b16 %v2138, %v2138
        %v2149 = vpack.c.b16 %v2139, %v2139
        %v2150 = vpack.c.b16 %v2140, %v2140
        %v2151 = vpack.c.b16 %v2141, %v2141
        %v2152 = vpack.c.b16 %v2142, %v2142
        %v2153 = vpack.c.b16 %v2143, %v2143
        %v2154 = vpack.c.b16 %v2144, %v2144
        %v2155 = vpack.c.b16 %v2145, %v2145
        %v2156 = vpack.c.b16 %v2146, %v2146
        %v2157 = vpack.c.b16 %v2147, %v2147
        %2168 = vst [vmem:[%s273] sm:$0xf] %v2148
        %2169 = vst [vmem:[%s273 + $0x4] sm:$0xf] %v2149
        %2170 = vst [vmem:[%s273 + $0x8] sm:$0xf] %v2150
        %2171 = vst [vmem:[%s273 + $0xc] sm:$0xf] %v2151
        %2172 = vst [vmem:[%s273 + $0x10] sm:$0xf] %v2152
        %2173 = vst [vmem:[%s273 + $0x14] sm:$0xf] %v2153
        %2174 = vst [vmem:[%s273 + $0x18] sm:$0xf] %v2154
        %2175 = vst [vmem:[%s273 + $0x1c] sm:$0xf] %v2155
        %2176 = vst [vmem:[%s273 + $0x20] sm:$0xf] %v2156
        %2177 = vst [vmem:[%s273 + $0x24] sm:$0xf] %v2157
        %s2178 = sand.u32 %s148, 1
        %s2179 = scalar_lea.sflag [#allocation4], %s2178
        %s2180 = sand.u32 %s148, 1
        %s2181 = smul.addr %s2180, 40
        %s2182 = scalar_lea.vmem [#allocation7], %s2181
        // Predicated region
        $region45: #{tpu_custom_call.1} parent=35 // pred_check
          %p2183 = pneg %p158
        $region46: #{tpu_custom_call.1} parent=35 // pred_check_branch
          %2185 = sbr.rel (%p2183) target = $region48
        $region47: #{tpu_custom_call.1} parent=35 // pred_region
          %s2187 = ssub.s32 640, 640
          %2188 = vsyncadd %s2179, %s2187
          %s2189 = smul.addr %s27, 10
          %s2190 = sadd.s32 %s26, %s2189
          %s2191 = smul.addr %s2190, 64
          %s2192 = scalar_lea.hbm %s4, %s2191
          %s2193 = sshll.u32 %s2182, 4
          %s2194 = int_to_ptr.vmem [resolvable:$true] %s2193
          %2199 = dma.vmem_to_hbm [thread:$0]  %s2194, 640, %s2192, %s2179, 64, 64, 4
        $region48: #{tpu_custom_call.1} parent=35 // pred_fallthru
          _
      $region36: #{tpu_custom_call.1} parent=5 // pred_fallthru
        _
      %p2200 = scmp.le.s32.totalorder 2, %s17
      // Predicated region
      $region49: #{tpu_custom_call.1} parent=5 // pred_check
        %p2201 = pneg %p2200
      $region50: #{tpu_custom_call.1} parent=5 // pred_check_branch
        %2203 = sbr.rel (%p2201) target = $region52
      $region51: #{tpu_custom_call.1} parent=5 // pred_region
        %s2204 = ssub.s32 %s17, 2
        // Predicated region
        $region53: #{tpu_custom_call.1} parent=51 // pred_check
          %p2205 = pneg %p164
        $region54: #{tpu_custom_call.1} parent=51 // pred_check_branch
          %2207 = sbr.rel (%p2205) target = $region56
        $region55: #{tpu_custom_call.1} parent=51 // pred_region
          %s2208 = sand.u32 %s149, 1
          %s2209 = scalar_lea.sflag [#allocation4], %s2208
          %s2210 = sand.u32 %s149, 1
          %s2211 = smul.addr %s2210, 40
          %s2212 = scalar_lea.vmem [#allocation7], %s2211
          %2213 = dma.done %s2209, 640
        $region56: #{tpu_custom_call.1} parent=51 // pred_fallthru
          _
      $region52: #{tpu_custom_call.1} parent=5 // pred_fallthru
        _
    $region6: #{tpu_custom_call.1} parent=1 // loop_footer
      %s21 = sadd.s32 1, %s17
    $region7: #{tpu_custom_call.1} parent=1 // loop_footer_branch
      %16 = sbr.rel target = $region3
    $region8: #{tpu_custom_call.1} parent=1 // loop_exit
      _
    %2214 = vsyncpa [#allocation3], 1
    %s2215 = scalar_lea.sflag [#allocation3], 1
    %2216 = vsyncpa %s2215, 1
    %2217 = vsyncpa [#allocation6], 1
    %2218 = vsyncpa [#allocation4], 1
    %s2219 = scalar_lea.sflag [#allocation4], 1
    %2220 = vsyncpa %s2219, 1

</llo_original>
